<compile_context>
chip_gen: v6e
topology: v6e:2x2x1
jax: 0.10.0
libtpu: 0.0.40
codegen_flags: <defaults>
</compile_context>

<pallas_src>
import numpy as np
import jax
import jax.numpy as jnp
from jax.experimental import pallas as pl
from jax.experimental.pallas import tpu as pltpu


# ----------------------------- Pallas kernel ------------------------------ #
def _span_kernel(x_ref, m_ref, w1_ref, b1_ref, w2_ref, b2_ref, w3_ref, b3_ref,
                 wc_ref, bc_ref, o_ref):
    h_tile, l_pad, d_in = x_ref.shape
    rows = h_tile * l_pad

    x = x_ref[...].reshape(rows, d_in)          # bf16 [rows, d_in]
    m = m_ref[...]                              # f32 [rows, 8] host-built masks

    # --- FFNN (eval mode: Dropout == identity). bf16 matmuls, f32 accumulate.
    h = jnp.dot(x, w1_ref[...], preferred_element_type=jnp.float32) + b1_ref[...]
    h = jnp.maximum(h, 0.0).astype(jnp.bfloat16)
    h = jnp.dot(h, w2_ref[...], preferred_element_type=jnp.float32) + b2_ref[...]
    h = jnp.maximum(h, 0.0).astype(jnp.bfloat16)
    h = jnp.dot(h, w3_ref[...], preferred_element_type=jnp.float32) + b3_ref[...]

    # Rows past the true slab length behave like the Conv1d zero padding.
    h = h * m[:, 0:1]

    # --- fused Conv1d(64->4,k3,p1) o Conv1d(4->2,k3,p1):
    # one matmul against host-precomputed effective weights [64, 14]
    # (5 taps x 2 out-channels + 2 boundary-correction matrices), then four
    # sublane rolls (XLU) with edge/head-boundary masks.
    g = jnp.dot(h, wc_ref[...], preferred_element_type=jnp.float32)   # [rows, 14]
    bc = bc_ref[...]                                                   # [1, 6]

    out = g[:, 4:6] + bc[:, 0:2]                 # centre tap + fused bias
    # We need tap[t] = g_d[t + d].  jnp.roll-style semantics: roll(x, s)[t] =
    # x[t - s], so the required shift is (-d); pltpu.roll only accepts
    # non-negative shifts, and the roll is circular, so use (-d) % rows.
    # Wraparound across head/block edges is zeroed by the masks below.
    # (offset d, g column for tap d, mask column keeping in-bounds rows)
    for d, col, mcol in ((-2, 0, 6), (-1, 2, 5), (1, 6, 3), (2, 8, 4)):
        shift = (-d) % rows                                   # non-negative
        tap = pltpu.roll(g[:, col:col + 2], shift=shift, axis=0)
        out = out + tap * m[:, mcol:mcol + 1]
    # Exact boundary corrections: conv2 zero-pads conv1's output at t=-1 / t=L,
    # the fused form does not -> subtract the virtual c1[-1] / c1[L] terms.
    out = out - m[:, 1:2] * (g[:, 10:12] + bc[:, 2:4])   # first row of each head
    out = out - m[:, 2:3] * (g[:, 12:14] + bc[:, 4:6])   # last valid row

    o_ref[...] = out.reshape(h_tile, l_pad, 2)


# ------------------------- host-side kernel setup -------------------------- #
def _fused_conv_params(params):
    """Fold Conv1d(64->4,k3,p1) o Conv1d(4->2,k3,p1) into a kernel-5 conv.

    Tap convention (matches PyTorch Conv1d): cw[k] applies to in[t + k - 1];
    when importing real PyTorch weights use cw[k] = torch_weight[:, :, k].T.
    """
    cw1, cb1 = params["cw1"], params["cb1"]     # [3,64,4], [1,4]
    cw2, cb2 = params["cw2"], params["cb2"]     # [3,4,2],  [1,2]
    taps = []
    for k in range(5):                          # effective offset d = k - 2
        w = jnp.zeros((cw1.shape[1], cw2.shape[2]), jnp.float32)
        for k1 in range(3):
            k2 = k - k1
            if 0 <= k2 <= 2:
                w = w + cw1[k1] @ cw2[k2]
        taps.append(w)
    wc_first = cw1[2] @ cw2[0]                  # leak of h[0] through virtual c1[-1]
    wc_last = cw1[0] @ cw2[2]                   # leak of h[L-1] through virtual c1[L]
    wconv = jnp.concatenate(taps + [wc_first, wc_last], axis=1)        # [64, 14]

    b_eff = cb2 + cb1 @ (cw2[0] + cw2[1] + cw2[2])                     # [1, 2]
    bc_first = cb1 @ cw2[0]
    bc_last = cb1 @ cw2[2]
    bconv = jnp.concatenate([b_eff, bc_first, bc_last], axis=1)        # [1, 6]
    return wconv.astype(jnp.float32), bconv.astype(jnp.float32)


def _vmem_limit_bytes():
    cap = 64 * 1024 * 1024                      # safe fallback (v7x physical)
    try:
        cap = int(pltpu.get_tpu_info().vmem_capacity_bytes)
    except Exception:
        pass
    return int(min(cap * 3 // 4, 100 * 1024 * 1024))


def _choose_h_tile(n_heads, l_pad, d_in, hidden, vmem_limit):
    # Static VMEM residents: bf16 FFNN weights + f32 conv/bias slabs (x2 buffers).
    weight_bytes = 2 * (2 * (d_in * hidden + hidden * 256 + 256 * 64)
                        + 4 * (64 * 14 + hidden + 256 + 64 + 32))
    avail = max(vmem_limit - weight_bytes - (2 << 20), 1 << 20)
    # Per (head x padded slot) row: double-buffered bf16 input, f32 activations,
    # bf16 casts feeding the MXU, masks, double-buffered f32 output.
    per_row = (2 * 2 * d_in
               + 4 * (hidden + 256 + 64 + 14 + 8)
               + 2 * (hidden + 256)
               + 2 * 4 * 2)
    h_tile = max(1, int(avail // (per_row * l_pad)))
    h_tile = min(h_tile, n_heads)
    if n_heads >= 2:          # keep >=2 grid steps so both v7x cores get work
        h_tile = min(h_tile, -(-n_heads // 2))
    return max(1, h_tile)


def span_scores(pair_slab, params):
    """pair_slab: [n_heads, max_len, 2*emb+64] -> scores [n_heads, max_len, 2]."""
    n_heads, l_true, d_in = pair_slab.shape
    hidden = params["w1"].shape[1]

    # Full sublane tiles for bf16 input.
    # TODO(synk): coarser bucketing of l_pad (e.g. powers of two) would trade a
    # little wasted compute for far fewer recompiles across documents.
    l_pad = max(16, -(-l_true // 16) * 16)

    vmem_limit = _vmem_limit_bytes()
    h_tile = _choose_h_tile(n_heads, l_pad, d_in, hidden, vmem_limit)
    n_heads_pad = -(-n_heads // h_tile) * h_tile
    grid = (n_heads_pad // h_tile,)

    x = jnp.zeros((n_heads_pad, l_pad, d_in), jnp.bfloat16)
    x = x.at[:n_heads, :l_true].set(pair_slab.astype(jnp.bfloat16))

    # Per-slot masks: {valid, is_first, is_last, keep d=+1, keep d=+2,
    #                  keep d=-1, keep d=-2, unused}
    slot = np.arange(l_pad)
    cols = np.stack([slot < l_true, slot == 0, slot == l_true - 1,
                     slot < l_pad - 1, slot < l_pad - 2,
                     slot >= 1, slot >= 2,
                     np.zeros_like(slot, dtype=bool)], axis=1)
    masks = jnp.asarray(np.tile(cols.astype(np.float32), (n_heads_pad, 1)))

    wconv, bconv = _fused_conv_params(params)
    w1 = params["w1"].astype(jnp.bfloat16); b1 = params["b1"]
    w2 = params["w2"].astype(jnp.bfloat16); b2 = params["b2"]
    w3 = params["w3"].astype(jnp.bfloat16); b3 = params["b3"]

    full = lambda a: pl.BlockSpec(a.shape, lambda i: (0,) * a.ndim)

    out = pl.pallas_call(
        _span_kernel,
        out_shape=jax.ShapeDtypeStruct((n_heads_pad, l_pad, 2), jnp.float32),
        grid=grid,
        in_specs=[
            pl.BlockSpec((h_tile, l_pad, d_in), lambda i: (i, 0, 0)),
            pl.BlockSpec((h_tile * l_pad, 8), lambda i: (i, 0)),
            full(w1), full(b1), full(w2), full(b2), full(w3), full(b3),
            full(wconv), full(bconv),
        ],
        out_specs=pl.BlockSpec((h_tile, l_pad, 2), lambda i: (i, 0, 0)),
        compiler_params=pltpu.CompilerParams(
            dimension_semantics=("parallel",),
            vmem_limit_bytes=vmem_limit),
    )(x, masks, w1, b1, w2, b2, w3, b3, wconv, bconv)

    return out[:n_heads, :l_true]


# ------------------ pure-JAX reference (PyTorch-shaped) -------------------- #
def span_scores_reference(pair_slab, params):
    """Mirrors the PyTorch structure (unfused convs), same bf16 FFNN policy."""
    x = pair_slab.astype(jnp.bfloat16)
    h = jnp.dot(x, params["w1"].astype(jnp.bfloat16),
                preferred_element_type=jnp.float32) + params["b1"]
    h = jnp.maximum(h, 0.0).astype(jnp.bfloat16)
    h = jnp.dot(h, params["w2"].astype(jnp.bfloat16),
                preferred_element_type=jnp.float32) + params["b2"]
    h = jnp.maximum(h, 0.0).astype(jnp.bfloat16)
    h = jnp.dot(h, params["w3"].astype(jnp.bfloat16),
                preferred_element_type=jnp.float32) + params["b3"]

    def conv1d_k3(inp, w, b):        # channel-last Conv1d(k=3, stride=1, pad=1)
        p = jnp.pad(inp, ((0, 0), (1, 1), (0, 0)))
        return (jnp.einsum("nlc,cd->nld", p[:, :-2], w[0])
                + jnp.einsum("nlc,cd->nld", p[:, 1:-1], w[1])
                + jnp.einsum("nlc,cd->nld", p[:, 2:], w[2]) + b)

    c1 = conv1d_k3(h, params["cw1"], params["cb1"])
    return conv1d_k3(c1, params["cw2"], params["cb2"])


# ------------------------------ parameters -------------------------------- #
def init_params(key, input_size, distance_emb_size=64):
    d_in = input_size * 2 + 64
    ks = jax.random.split(key, 6)

    def lin(k, fan_in, fan_out):
        bound = 1.0 / np.sqrt(fan_in)
        kw, kb = jax.random.split(k)
        w = jax.random.uniform(kw, (fan_in, fan_out), jnp.float32, -bound, bound)
        b = jax.random.uniform(kb, (1, fan_out), jnp.float32, -bound, bound)
        return w, b

    def conv(k, cin, cout):
        bound = 1.0 / np.sqrt(cin * 3)
        kw, kb = jax.random.split(k)
        # stored as [tap, in_ch, out_ch] (== PyTorch weight[o, c, k] transposed;
        # keep k ascending when importing real weights).
        w = jax.random.uniform(kw, (3, cin, cout), jnp.float32, -bound, bound)
        b = jax.random.uniform(kb, (1, cout), jnp.float32, -bound, bound)
        return w, b

    w1, b1 = lin(ks[0], d_in, input_size)
    w2, b2 = lin(ks[1], input_size, 256)
    w3, b3 = lin(ks[2], 256, 64)
    cw1, cb1 = conv(ks[3], 64, 4)
    cw2, cb2 = conv(ks[4], 4, 2)
    emb = jax.random.normal(ks[5], (128, distance_emb_size), jnp.float32)
    return dict(w1=w1, b1=b1, w2=w2, b2=b2, w3=w3, b3=b3,
                cw1=cw1, cb1=cb1, cw2=cw2, cb2=cb2, emb=emb)


# ---------------------------- forward (glue) ------------------------------ #
def span_predictor_forward(params, sent_id, words, heads_ids, clusters,
                           cluster_averaging="none", training=False):
    sent_id = np.asarray(sent_id)
    heads_np = np.asarray(heads_ids)
    n_words = words.shape[0]
    n_heads = heads_np.shape[0]

    rel = heads_np[:, None] - np.arange(n_words)[None, :]            # [n_heads, n_words]
    emb_ids = rel + 63
    emb_ids = np.where((emb_ids < 0) | (emb_ids > 126), 127, emb_ids)
    same_sent = sent_id[heads_np][:, None] == sent_id[None, :]

    # torch.nonzero(as_tuple=True) is row-major; np.nonzero matches that.
    rows, cols = np.nonzero(same_sent)
    lengths = same_sent.sum(axis=1)
    max_len = int(lengths.max())
    slots = np.concatenate([np.arange(int(l)) for l in lengths])     # slot inside padded row

    if cluster_averaging == "none":
        head_emb = words[heads_np[rows]]
    else:
        cluster_avgs = []
        for cluster in clusters:
            cw = words[np.asarray(cluster)]
            cluster_avgs.append(cw.mean(axis=0) if cluster_averaging == "mean"
                                else cw.max(axis=0))
        cluster_avgs = jnp.stack(cluster_avgs)
        row_to_cluster = np.concatenate(
            [np.full(len(c), i, dtype=np.int64) for i, c in enumerate(clusters)])
        head_emb = cluster_avgs[row_to_cluster[rows]]

    pair_matrix = jnp.concatenate(
        [head_emb, words[cols], params["emb"][emb_ids[rows, cols]]], axis=1)

    d_in = pair_matrix.shape[-1]
    pair_slab = jnp.zeros((n_heads, max_len, d_in), jnp.float32)
    pair_slab = pair_slab.at[rows, slots].set(pair_matrix)

    res = span_scores(pair_slab, params)                 # [n_heads, max_len, 2]

    scores = jnp.full((n_heads, n_words, 2), -jnp.inf, jnp.float32)
    scores = scores.at[rows, cols].set(res[rows, slots])

    if not training:
        rel_j = jnp.asarray(rel)
        valid_starts = jnp.log((rel_j >= 0).astype(jnp.float32))
        valid_ends = jnp.log((rel_j <= 0).astype(jnp.float32))
        scores = scores + jnp.stack((valid_starts, valid_ends), axis=2)
    # TODO(synk): training-mode Dropout(0.3) RNG is not modeled (eval-mode kernel).
    return scores


# --------------------------------- main ------------------------------------ #
if __name__ == "__main__":
    key = jax.random.PRNGKey(0)
    input_size = 32          # emb_size of `words`
    distance_emb_size = 64   # must be 64 so cat(...) matches ffnn input (2*E + 64)

    params = init_params(key, input_size, distance_emb_size)
    d_in = 2 * input_size + 64

    # --- kernel vs pure-JAX reference on a random packed-pair slab ----------
    slab = jax.random.normal(jax.random.fold_in(key, 7), (5, 13, d_in), jnp.float32)
    got = jax.block_until_ready(span_scores(slab, params))
    ref = jax.block_until_ready(span_scores_reference(slab, params))
    assert got.shape == ref.shape == (5, 13, 2)
    assert bool(jnp.allclose(got, ref, rtol=2e-2, atol=2e-2)), \
        float(jnp.max(jnp.abs(got - ref)))

    # --- full forward pass ---------------------------------------------------
    n_words = 16
    words = jax.random.normal(jax.random.fold_in(key, 1),
                              (n_words, input_size), jnp.float32)
    sent_id = np.array([0] * 5 + [1] * 6 + [2] * 5)      # 3 sentences over 16 words
    heads_ids = np.array([2, 7, 9, 13])                  # n_heads = 4
    clusters = [[2, 7], [9, 13]]

    scores = span_predictor_forward(params, sent_id, words, heads_ids, clusters,
                                    cluster_averaging="none", training=False)
    scores = jax.block_until_ready(scores)

    assert scores.shape == (heads_ids.shape[0], n_words, 2)
    assert bool(jnp.all(jnp.isfinite(scores) | (scores == -jnp.inf)))
    print("KERNEL_OK")
</pallas_src>

<mosaic_0001>
module attributes {stable_mosaic.version = 11 : i64} {
  func.func @_span_kernel(%arg0: i32, %arg1: memref<3x16x128xbf16, #tpu.memory_space<vmem>>, %arg2: memref<48x8xf32, #tpu.memory_space<vmem>>, %arg3: memref<128x32xbf16, #tpu.memory_space<vmem>>, %arg4: memref<1x32xf32, #tpu.memory_space<vmem>>, %arg5: memref<32x256xbf16, #tpu.memory_space<vmem>>, %arg6: memref<1x256xf32, #tpu.memory_space<vmem>>, %arg7: memref<256x64xbf16, #tpu.memory_space<vmem>>, %arg8: memref<1x64xf32, #tpu.memory_space<vmem>>, %arg9: memref<64x14xf32, #tpu.memory_space<vmem>>, %arg10: memref<1x6xf32, #tpu.memory_space<vmem>>, %arg11: memref<3x16x2xf32, #tpu.memory_space<vmem>>) attributes {dimension_semantics = [#tpu.dimension_semantics<parallel>], iteration_bounds = array<i64: 2>, scalar_prefetch = 0 : i64, scratch_operands = 0 : i64, tpu.core_type = #tpu.core_type<tc>, window_params = [{transform_indices = @transform_0, window_bounds = array<i64: 3, 16, 128>}, {transform_indices = @transform_1, window_bounds = array<i64: 48, 8>}, {pipeline_mode = #tpu.pipeline_mode<synchronous>, transform_indices = @transform_2, window_bounds = array<i64: 128, 32>}, {pipeline_mode = #tpu.pipeline_mode<synchronous>, transform_indices = @transform_3, window_bounds = array<i64: 1, 32>}, {pipeline_mode = #tpu.pipeline_mode<synchronous>, transform_indices = @transform_4, window_bounds = array<i64: 32, 256>}, {pipeline_mode = #tpu.pipeline_mode<synchronous>, transform_indices = @transform_5, window_bounds = array<i64: 1, 256>}, {pipeline_mode = #tpu.pipeline_mode<synchronous>, transform_indices = @transform_6, window_bounds = array<i64: 256, 64>}, {pipeline_mode = #tpu.pipeline_mode<synchronous>, transform_indices = @transform_7, window_bounds = array<i64: 1, 64>}, {pipeline_mode = #tpu.pipeline_mode<synchronous>, transform_indices = @transform_8, window_bounds = array<i64: 64, 14>}, {pipeline_mode = #tpu.pipeline_mode<synchronous>, transform_indices = @transform_9, window_bounds = array<i64: 1, 6>}, {transform_indices = @transform_10, window_bounds = array<i64: 3, 16, 2>}]} {
    %c0 = arith.constant 0 : index
    %c0_0 = arith.constant 0 : index
    %c0_1 = arith.constant 0 : index
    %0 = vector.load %arg1[%c0, %c0_0, %c0_1] : memref<3x16x128xbf16, #tpu.memory_space<vmem>>, vector<3x16x128xbf16>
    %1 = vector.shape_cast %0 : vector<3x16x128xbf16> to vector<48x128xbf16>
    %c0_2 = arith.constant 0 : index
    %c0_3 = arith.constant 0 : index
    %2 = vector.load %arg2[%c0_2, %c0_3] : memref<48x8xf32, #tpu.memory_space<vmem>>, vector<48x8xf32>
    %c0_4 = arith.constant 0 : index
    %c0_5 = arith.constant 0 : index
    %3 = vector.load %arg3[%c0_4, %c0_5] : memref<128x32xbf16, #tpu.memory_space<vmem>>, vector<128x32xbf16>
    %cst = arith.constant dense<0.000000e+00> : vector<48x32xf32>
    %4 = tpu.matmul %1, %3, %cst {dimension_numbers = #tpu.dot_dimension_numbers<[1], [0], [0], [1], [0, 0, 1, 1], [], []>} : vector<48x128xbf16>, vector<128x32xbf16>, vector<48x32xf32> -> vector<48x32xf32>
    %c0_6 = arith.constant 0 : index
    %c0_7 = arith.constant 0 : index
    %5 = vector.load %arg4[%c0_6, %c0_7] : memref<1x32xf32, #tpu.memory_space<vmem>>, vector<1x32xf32>
    %6 = vector.broadcast %5 : vector<1x32xf32> to vector<48x32xf32>
    %7 = arith.addf %4, %6 : vector<48x32xf32>
    %cst_8 = arith.constant 0.000000e+00 : f32
    %8 = vector.broadcast %cst_8 : f32 to vector<48x32xf32>
    %9 = arith.maximumf %7, %8 : vector<48x32xf32>
    %10 = arith.truncf %9 : vector<48x32xf32> to vector<48x32xbf16>
    %c0_9 = arith.constant 0 : index
    %c0_10 = arith.constant 0 : index
    %11 = vector.load %arg5[%c0_9, %c0_10] : memref<32x256xbf16, #tpu.memory_space<vmem>>, vector<32x256xbf16>
    %cst_11 = arith.constant dense<0.000000e+00> : vector<48x256xf32>
    %12 = tpu.matmul %10, %11, %cst_11 {dimension_numbers = #tpu.dot_dimension_numbers<[1], [0], [0], [1], [0, 0, 1, 1], [], []>} : vector<48x32xbf16>, vector<32x256xbf16>, vector<48x256xf32> -> vector<48x256xf32>
    %c0_12 = arith.constant 0 : index
    %c0_13 = arith.constant 0 : index
    %13 = vector.load %arg6[%c0_12, %c0_13] : memref<1x256xf32, #tpu.memory_space<vmem>>, vector<1x256xf32>
    %14 = vector.broadcast %13 : vector<1x256xf32> to vector<48x256xf32>
    %15 = arith.addf %12, %14 : vector<48x256xf32>
    %cst_14 = arith.constant 0.000000e+00 : f32
    %16 = vector.broadcast %cst_14 : f32 to vector<48x256xf32>
    %17 = arith.maximumf %15, %16 : vector<48x256xf32>
    %18 = arith.truncf %17 : vector<48x256xf32> to vector<48x256xbf16>
    %c0_15 = arith.constant 0 : index
    %c0_16 = arith.constant 0 : index
    %19 = vector.load %arg7[%c0_15, %c0_16] : memref<256x64xbf16, #tpu.memory_space<vmem>>, vector<256x64xbf16>
    %cst_17 = arith.constant dense<0.000000e+00> : vector<48x64xf32>
    %20 = tpu.matmul %18, %19, %cst_17 {dimension_numbers = #tpu.dot_dimension_numbers<[1], [0], [0], [1], [0, 0, 1, 1], [], []>} : vector<48x256xbf16>, vector<256x64xbf16>, vector<48x64xf32> -> vector<48x64xf32>
    %c0_18 = arith.constant 0 : index
    %c0_19 = arith.constant 0 : index
    %21 = vector.load %arg8[%c0_18, %c0_19] : memref<1x64xf32, #tpu.memory_space<vmem>>, vector<1x64xf32>
    %22 = vector.broadcast %21 : vector<1x64xf32> to vector<48x64xf32>
    %23 = arith.addf %20, %22 : vector<48x64xf32>
    %24 = vector.extract_strided_slice %2 {offsets = [0, 0], sizes = [48, 1], strides = [1, 1]} : vector<48x8xf32> to vector<48x1xf32>
    %25 = vector.broadcast %24 : vector<48x1xf32> to vector<48x64xf32>
    %26 = arith.mulf %23, %25 : vector<48x64xf32>
    %c0_20 = arith.constant 0 : index
    %c0_21 = arith.constant 0 : index
    %27 = vector.load %arg9[%c0_20, %c0_21] : memref<64x14xf32, #tpu.memory_space<vmem>>, vector<64x14xf32>
    %cst_22 = arith.constant dense<0.000000e+00> : vector<48x14xf32>
    %28 = tpu.matmul %26, %27, %cst_22 {dimension_numbers = #tpu.dot_dimension_numbers<[1], [0], [0], [1], [0, 0, 1, 1], [], []>} : vector<48x64xf32>, vector<64x14xf32>, vector<48x14xf32> -> vector<48x14xf32>
    %c0_23 = arith.constant 0 : index
    %c0_24 = arith.constant 0 : index
    %29 = vector.load %arg10[%c0_23, %c0_24] : memref<1x6xf32, #tpu.memory_space<vmem>>, vector<1x6xf32>
    %30 = vector.extract_strided_slice %28 {offsets = [0, 4], sizes = [48, 2], strides = [1, 1]} : vector<48x14xf32> to vector<48x2xf32>
    %31 = vector.extract_strided_slice %29 {offsets = [0, 0], sizes = [1, 2], strides = [1, 1]} : vector<1x6xf32> to vector<1x2xf32>
    %32 = vector.broadcast %31 : vector<1x2xf32> to vector<48x2xf32>
    %33 = arith.addf %30, %32 : vector<48x2xf32>
    %34 = vector.extract_strided_slice %28 {offsets = [0, 0], sizes = [48, 2], strides = [1, 1]} : vector<48x14xf32> to vector<48x2xf32>
    %c2_i32 = arith.constant 2 : i32
    %35 = tpu.dynamic_rotate %34 by %c2_i32 dim 0 : vector<48x2xf32>, i32 -> vector<48x2xf32>
    %36 = vector.extract_strided_slice %2 {offsets = [0, 6], sizes = [48, 1], strides = [1, 1]} : vector<48x8xf32> to vector<48x1xf32>
    %37 = vector.broadcast %36 : vector<48x1xf32> to vector<48x2xf32>
    %38 = arith.mulf %35, %37 : vector<48x2xf32>
    %39 = arith.addf %33, %38 : vector<48x2xf32>
    %40 = vector.extract_strided_slice %28 {offsets = [0, 2], sizes = [48, 2], strides = [1, 1]} : vector<48x14xf32> to vector<48x2xf32>
    %c1_i32 = arith.constant 1 : i32
    %41 = tpu.dynamic_rotate %40 by %c1_i32 dim 0 : vector<48x2xf32>, i32 -> vector<48x2xf32>
    %42 = vector.extract_strided_slice %2 {offsets = [0, 5], sizes = [48, 1], strides = [1, 1]} : vector<48x8xf32> to vector<48x1xf32>
    %43 = vector.broadcast %42 : vector<48x1xf32> to vector<48x2xf32>
    %44 = arith.mulf %41, %43 : vector<48x2xf32>
    %45 = arith.addf %39, %44 : vector<48x2xf32>
    %46 = vector.extract_strided_slice %28 {offsets = [0, 6], sizes = [48, 2], strides = [1, 1]} : vector<48x14xf32> to vector<48x2xf32>
    %c47_i32 = arith.constant 47 : i32
    %47 = tpu.dynamic_rotate %46 by %c47_i32 dim 0 : vector<48x2xf32>, i32 -> vector<48x2xf32>
    %48 = vector.extract_strided_slice %2 {offsets = [0, 3], sizes = [48, 1], strides = [1, 1]} : vector<48x8xf32> to vector<48x1xf32>
    %49 = vector.broadcast %48 : vector<48x1xf32> to vector<48x2xf32>
    %50 = arith.mulf %47, %49 : vector<48x2xf32>
    %51 = arith.addf %45, %50 : vector<48x2xf32>
    %52 = vector.extract_strided_slice %28 {offsets = [0, 8], sizes = [48, 2], strides = [1, 1]} : vector<48x14xf32> to vector<48x2xf32>
    %c46_i32 = arith.constant 46 : i32
    %53 = tpu.dynamic_rotate %52 by %c46_i32 dim 0 : vector<48x2xf32>, i32 -> vector<48x2xf32>
    %54 = vector.extract_strided_slice %2 {offsets = [0, 4], sizes = [48, 1], strides = [1, 1]} : vector<48x8xf32> to vector<48x1xf32>
    %55 = vector.broadcast %54 : vector<48x1xf32> to vector<48x2xf32>
    %56 = arith.mulf %53, %55 : vector<48x2xf32>
    %57 = arith.addf %51, %56 : vector<48x2xf32>
    %58 = vector.extract_strided_slice %2 {offsets = [0, 1], sizes = [48, 1], strides = [1, 1]} : vector<48x8xf32> to vector<48x1xf32>
    %59 = vector.extract_strided_slice %28 {offsets = [0, 10], sizes = [48, 2], strides = [1, 1]} : vector<48x14xf32> to vector<48x2xf32>
    %60 = vector.extract_strided_slice %29 {offsets = [0, 2], sizes = [1, 2], strides = [1, 1]} : vector<1x6xf32> to vector<1x2xf32>
    %61 = vector.broadcast %60 : vector<1x2xf32> to vector<48x2xf32>
    %62 = arith.addf %59, %61 : vector<48x2xf32>
    %63 = vector.broadcast %58 : vector<48x1xf32> to vector<48x2xf32>
    %64 = arith.mulf %63, %62 : vector<48x2xf32>
    %65 = arith.subf %57, %64 : vector<48x2xf32>
    %66 = vector.extract_strided_slice %2 {offsets = [0, 2], sizes = [48, 1], strides = [1, 1]} : vector<48x8xf32> to vector<48x1xf32>
    %67 = vector.extract_strided_slice %28 {offsets = [0, 12], sizes = [48, 2], strides = [1, 1]} : vector<48x14xf32> to vector<48x2xf32>
    %68 = vector.extract_strided_slice %29 {offsets = [0, 4], sizes = [1, 2], strides = [1, 1]} : vector<1x6xf32> to vector<1x2xf32>
    %69 = vector.broadcast %68 : vector<1x2xf32> to vector<48x2xf32>
    %70 = arith.addf %67, %69 : vector<48x2xf32>
    %71 = vector.broadcast %66 : vector<48x1xf32> to vector<48x2xf32>
    %72 = arith.mulf %71, %70 : vector<48x2xf32>
    %73 = arith.subf %65, %72 : vector<48x2xf32>
    %74 = vector.shape_cast %73 : vector<48x2xf32> to vector<3x16x2xf32>
    %c0_25 = arith.constant 0 : index
    %c0_26 = arith.constant 0 : index
    %c0_27 = arith.constant 0 : index
    %75 = vector.load %arg11[%c0_25, %c0_26, %c0_27] : memref<3x16x2xf32, #tpu.memory_space<vmem>>, vector<3x16x2xf32>
    tpu.vector_store %arg11[%c0_25, %c0_26, %c0_27], %74 {strides = array<i32>} : memref<3x16x2xf32, #tpu.memory_space<vmem>>, vector<3x16x2xf32>,
    return
  }
  func.func @transform_0(%arg0: i32) -> (i32, i32, i32) {
    %c0_i32 = arith.constant 0 : i32
    %c0_i32_0 = arith.constant 0 : i32
    %c0_i32_1 = arith.constant 0 : i32
    return %arg0, %c0_i32, %c0_i32_0 : i32, i32, i32
  }
  func.func @transform_1(%arg0: i32) -> (i32, i32) {
    %c0_i32 = arith.constant 0 : i32
    %c0_i32_0 = arith.constant 0 : i32
    return %arg0, %c0_i32 : i32, i32
  }
  func.func @transform_2(%arg0: i32) -> (i32, i32) {
    %c0_i32 = arith.constant 0 : i32
    %c0_i32_0 = arith.constant 0 : i32
    %c0_i32_1 = arith.constant 0 : i32
    return %c0_i32, %c0_i32_0 : i32, i32
  }
  func.func @transform_3(%arg0: i32) -> (i32, i32) {
    %c0_i32 = arith.constant 0 : i32
    %c0_i32_0 = arith.constant 0 : i32
    %c0_i32_1 = arith.constant 0 : i32
    return %c0_i32, %c0_i32_0 : i32, i32
  }
  func.func @transform_4(%arg0: i32) -> (i32, i32) {
    %c0_i32 = arith.constant 0 : i32
    %c0_i32_0 = arith.constant 0 : i32
    %c0_i32_1 = arith.constant 0 : i32
    return %c0_i32, %c0_i32_0 : i32, i32
  }
  func.func @transform_5(%arg0: i32) -> (i32, i32) {
    %c0_i32 = arith.constant 0 : i32
    %c0_i32_0 = arith.constant 0 : i32
    %c0_i32_1 = arith.constant 0 : i32
    return %c0_i32, %c0_i32_0 : i32, i32
  }
  func.func @transform_6(%arg0: i32) -> (i32, i32) {
    %c0_i32 = arith.constant 0 : i32
    %c0_i32_0 = arith.constant 0 : i32
    %c0_i32_1 = arith.constant 0 : i32
    return %c0_i32, %c0_i32_0 : i32, i32
  }
  func.func @transform_7(%arg0: i32) -> (i32, i32) {
    %c0_i32 = arith.constant 0 : i32
    %c0_i32_0 = arith.constant 0 : i32
    %c0_i32_1 = arith.constant 0 : i32
    return %c0_i32, %c0_i32_0 : i32, i32
  }
  func.func @transform_8(%arg0: i32) -> (i32, i32) {
    %c0_i32 = arith.constant 0 : i32
    %c0_i32_0 = arith.constant 0 : i32
    %c0_i32_1 = arith.constant 0 : i32
    return %c0_i32, %c0_i32_0 : i32, i32
  }
  func.func @transform_9(%arg0: i32) -> (i32, i32) {
    %c0_i32 = arith.constant 0 : i32
    %c0_i32_0 = arith.constant 0 : i32
    %c0_i32_1 = arith.constant 0 : i32
    return %c0_i32, %c0_i32_0 : i32, i32
  }
  func.func @transform_10(%arg0: i32) -> (i32, i32, i32) {
    %c0_i32 = arith.constant 0 : i32
    %c0_i32_0 = arith.constant 0 : i32
    %c0_i32_1 = arith.constant 0 : i32
    return %arg0, %c0_i32, %c0_i32_0 : i32, i32, i32
  }
}

</mosaic_0001>

<llo_original>
// kernel: tpu_custom_call.1
$region0: #{tpu_custom_call.1}
  #allocation0 [shape = 'u32[]', space=smem, size = 0x4, offset = 0x4, fixed_abs, tag = 'smem constant byte address 0x4 - core index']
  #allocation1 [shape = 'u32[144,128]{1,0:T(1,128)}', space=vmem, size = 0x12000, scoped, tag = 'internal scratch']
  %s0 = inlined_call_operand.vmem [shape: bf16[6,16,128], index: 0, kind: input, shape index: {}]
  %s1 = inlined_call_operand.vmem [shape: f32[96,8], index: 1, kind: input, shape index: {}]
  %s2 = inlined_call_operand.vmem [shape: bf16[128,32], index: 2, kind: input, shape index: {}]
  %s3 = inlined_call_operand.vmem [shape: f32[1,32], index: 3, kind: input, shape index: {}]
  %s4 = inlined_call_operand.vmem [shape: bf16[32,256], index: 4, kind: input, shape index: {}]
  %s5 = inlined_call_operand.vmem [shape: f32[1,256], index: 5, kind: input, shape index: {}]
  %s6 = inlined_call_operand.vmem [shape: bf16[256,64], index: 6, kind: input, shape index: {}]
  %s7 = inlined_call_operand.vmem [shape: f32[1,64], index: 7, kind: input, shape index: {}]
  %s8 = inlined_call_operand.vmem [shape: f32[64,14], index: 8, kind: input, shape index: {}]
  %s9 = inlined_call_operand.vmem [shape: f32[1,6], index: 9, kind: input, shape index: {}]
  %s10 = inlined_call_operand.vmem [shape: f32[6,16,2], index: 10, kind: output, shape index: {}]
  %s11 = sld [smem:[#allocation0]]
  $region73: #{tpu_custom_call.1} parent=0
    _
  %s13 = ssub.s32 1, %s11
  %s14 = scalar_select 0, %s13, %s11
  loop: start=0, step=1, limit=4
  $region2: #{tpu_custom_call.1} parent=0 // loop_pre_header
    _
  $region3: #{tpu_custom_call.1} parent=0 // loop_header
    %s16 = sphi 0, %s20
    %p17 = scmp.ge.s32.totalorder %s16, 4
    %s26 = sphi 0, %s28
    %s29 = sphi 0, %s26
    %s30 = sphi 0, %s29
    %s46 = sphi 0, %s30
    %s52 = sphi 0, %s54
    %s55 = sphi 0, %s52
    %s56 = sphi 0, %s55
    %s72 = sphi 0, %s56
    %s76 = sphi 0, %s76
    %s78 = sphi 0, %s76
    %s79 = sphi 0, %s78
    %s93 = sphi 0, %s79
    %s97 = sphi 0, %s97
    %s99 = sphi 0, %s97
    %s100 = sphi 0, %s99
    %s114 = sphi 0, %s100
    %s118 = sphi 0, %s118
    %s120 = sphi 0, %s118
    %s121 = sphi 0, %s120
    %s135 = sphi 0, %s121
    %s139 = sphi 0, %s139
    %s141 = sphi 0, %s139
    %s142 = sphi 0, %s141
    %s156 = sphi 0, %s142
    %s160 = sphi 0, %s160
    %s162 = sphi 0, %s160
    %s163 = sphi 0, %s162
    %s177 = sphi 0, %s163
    %s181 = sphi 0, %s181
    %s183 = sphi 0, %s181
    %s184 = sphi 0, %s183
    %s198 = sphi 0, %s184
    %s202 = sphi 0, %s202
    %s204 = sphi 0, %s202
    %s205 = sphi 0, %s204
    %s219 = sphi 0, %s205
    %s223 = sphi 0, %s223
    %s225 = sphi 0, %s223
    %s226 = sphi 0, %s225
    %s240 = sphi 0, %s226
    %s246 = sphi 0, %s248
    %s249 = sphi 0, %s246
    %s250 = sphi 0, %s249
    %s266 = sphi 0, %s250
  $region4: #{tpu_custom_call.1} parent=0 // loop_header_branch
    %19 = sbr.rel (%p17) target = $region8
  $region5: #{tpu_custom_call.1} parent=0 // loop_body
    %s21 = ssub.s32 %s16, 1
    %s22 = ssub.s32 %s16, 2
    %s23 = sadd.s32 %s16, 1
    %s24 = ssub.s32 %s16, %s23
    %p25 = scmp.eq.s32.totalorder %s24, 0
    %s27 = sadd.s32 %s26, 1
    %s28 = scalar_select %p25, %s26, %s27
    %p31 = pneg %p25
    %p32 = scmp.eq.s32.totalorder %s16, 1
    %p33 = por %p31, %p32
    %p34 = scmp.ne.s32.totalorder %s26, %s29
    %p35 = scmp.eq.s32.totalorder %s16, 0
    %p36 = por %p34, %p35
    %p37 = scmp.ne.s32.totalorder %s26, %s29
    %p38 = scmp.eq.s32.totalorder %s21, 1
    %p39 = por %p37, %p38
    %p40 = scmp.ne.s32.totalorder %s29, %s30
    %p41 = scmp.eq.s32.totalorder %s21, 0
    %p42 = por %p40, %p41
    %p43 = scmp.ne.s32.totalorder %s29, %s30
    %p44 = scmp.eq.s32.totalorder %s22, 1
    %p45 = por %p43, %p44
    %p47 = scmp.ne.s32.totalorder %s30, %s46
    %p48 = scmp.eq.s32.totalorder %s22, 0
    %p49 = por %p47, %p48
    %s50 = ssub.s32 %s16, %s23
    %p51 = scmp.eq.s32.totalorder %s50, 0
    %s53 = sadd.s32 %s52, 1
    %s54 = scalar_select %p51, %s52, %s53
    %p57 = pneg %p51
    %p58 = scmp.eq.s32.totalorder %s16, 1
    %p59 = por %p57, %p58
    %p60 = scmp.ne.s32.totalorder %s52, %s55
    %p61 = scmp.eq.s32.totalorder %s16, 0
    %p62 = por %p60, %p61
    %p63 = scmp.ne.s32.totalorder %s52, %s55
    %p64 = scmp.eq.s32.totalorder %s21, 1
    %p65 = por %p63, %p64
    %p66 = scmp.ne.s32.totalorder %s55, %s56
    %p67 = scmp.eq.s32.totalorder %s21, 0
    %p68 = por %p66, %p67
    %p69 = scmp.ne.s32.totalorder %s55, %s56
    %p70 = scmp.eq.s32.totalorder %s22, 1
    %p71 = por %p69, %p70
    %p73 = scmp.ne.s32.totalorder %s56, %s72
    %p74 = scmp.eq.s32.totalorder %s22, 0
    %p75 = por %p73, %p74
    %s77 = sadd.s32 %s76, 1
    %p80 = scmp.eq.s32.totalorder %s16, 1
    %p81 = scmp.ne.s32.totalorder %s76, %s78
    %p82 = scmp.eq.s32.totalorder %s16, 0
    %p83 = por %p81, %p82
    %p84 = scmp.ne.s32.totalorder %s76, %s78
    %p85 = scmp.eq.s32.totalorder %s21, 1
    %p86 = por %p84, %p85
    %p87 = scmp.ne.s32.totalorder %s78, %s79
    %p88 = scmp.eq.s32.totalorder %s21, 0
    %p89 = por %p87, %p88
    %p90 = scmp.ne.s32.totalorder %s78, %s79
    %p91 = scmp.eq.s32.totalorder %s22, 1
    %p92 = por %p90, %p91
    %p94 = scmp.ne.s32.totalorder %s79, %s93
    %p95 = scmp.eq.s32.totalorder %s22, 0
    %p96 = por %p94, %p95
    %s98 = sadd.s32 %s97, 1
    %p101 = scmp.eq.s32.totalorder %s16, 1
    %p102 = scmp.ne.s32.totalorder %s97, %s99
    %p103 = scmp.eq.s32.totalorder %s16, 0
    %p104 = por %p102, %p103
    %p105 = scmp.ne.s32.totalorder %s97, %s99
    %p106 = scmp.eq.s32.totalorder %s21, 1
    %p107 = por %p105, %p106
    %p108 = scmp.ne.s32.totalorder %s99, %s100
    %p109 = scmp.eq.s32.totalorder %s21, 0
    %p110 = por %p108, %p109
    %p111 = scmp.ne.s32.totalorder %s99, %s100
    %p112 = scmp.eq.s32.totalorder %s22, 1
    %p113 = por %p111, %p112
    %p115 = scmp.ne.s32.totalorder %s100, %s114
    %p116 = scmp.eq.s32.totalorder %s22, 0
    %p117 = por %p115, %p116
    %s119 = sadd.s32 %s118, 1
    %p122 = scmp.eq.s32.totalorder %s16, 1
    %p123 = scmp.ne.s32.totalorder %s118, %s120
    %p124 = scmp.eq.s32.totalorder %s16, 0
    %p125 = por %p123, %p124
    %p126 = scmp.ne.s32.totalorder %s118, %s120
    %p127 = scmp.eq.s32.totalorder %s21, 1
    %p128 = por %p126, %p127
    %p129 = scmp.ne.s32.totalorder %s120, %s121
    %p130 = scmp.eq.s32.totalorder %s21, 0
    %p131 = por %p129, %p130
    %p132 = scmp.ne.s32.totalorder %s120, %s121
    %p133 = scmp.eq.s32.totalorder %s22, 1
    %p134 = por %p132, %p133
    %p136 = scmp.ne.s32.totalorder %s121, %s135
    %p137 = scmp.eq.s32.totalorder %s22, 0
    %p138 = por %p136, %p137
    %s140 = sadd.s32 %s139, 1
    %p143 = scmp.eq.s32.totalorder %s16, 1
    %p144 = scmp.ne.s32.totalorder %s139, %s141
    %p145 = scmp.eq.s32.totalorder %s16, 0
    %p146 = por %p144, %p145
    %p147 = scmp.ne.s32.totalorder %s139, %s141
    %p148 = scmp.eq.s32.totalorder %s21, 1
    %p149 = por %p147, %p148
    %p150 = scmp.ne.s32.totalorder %s141, %s142
    %p151 = scmp.eq.s32.totalorder %s21, 0
    %p152 = por %p150, %p151
    %p153 = scmp.ne.s32.totalorder %s141, %s142
    %p154 = scmp.eq.s32.totalorder %s22, 1
    %p155 = por %p153, %p154
    %p157 = scmp.ne.s32.totalorder %s142, %s156
    %p158 = scmp.eq.s32.totalorder %s22, 0
    %p159 = por %p157, %p158
    %s161 = sadd.s32 %s160, 1
    %p164 = scmp.eq.s32.totalorder %s16, 1
    %p165 = scmp.ne.s32.totalorder %s160, %s162
    %p166 = scmp.eq.s32.totalorder %s16, 0
    %p167 = por %p165, %p166
    %p168 = scmp.ne.s32.totalorder %s160, %s162
    %p169 = scmp.eq.s32.totalorder %s21, 1
    %p170 = por %p168, %p169
    %p171 = scmp.ne.s32.totalorder %s162, %s163
    %p172 = scmp.eq.s32.totalorder %s21, 0
    %p173 = por %p171, %p172
    %p174 = scmp.ne.s32.totalorder %s162, %s163
    %p175 = scmp.eq.s32.totalorder %s22, 1
    %p176 = por %p174, %p175
    %p178 = scmp.ne.s32.totalorder %s163, %s177
    %p179 = scmp.eq.s32.totalorder %s22, 0
    %p180 = por %p178, %p179
    %s182 = sadd.s32 %s181, 1
    %p185 = scmp.eq.s32.totalorder %s16, 1
    %p186 = scmp.ne.s32.totalorder %s181, %s183
    %p187 = scmp.eq.s32.totalorder %s16, 0
    %p188 = por %p186, %p187
    %p189 = scmp.ne.s32.totalorder %s181, %s183
    %p190 = scmp.eq.s32.totalorder %s21, 1
    %p191 = por %p189, %p190
    %p192 = scmp.ne.s32.totalorder %s183, %s184
    %p193 = scmp.eq.s32.totalorder %s21, 0
    %p194 = por %p192, %p193
    %p195 = scmp.ne.s32.totalorder %s183, %s184
    %p196 = scmp.eq.s32.totalorder %s22, 1
    %p197 = por %p195, %p196
    %p199 = scmp.ne.s32.totalorder %s184, %s198
    %p200 = scmp.eq.s32.totalorder %s22, 0
    %p201 = por %p199, %p200
    %s203 = sadd.s32 %s202, 1
    %p206 = scmp.eq.s32.totalorder %s16, 1
    %p207 = scmp.ne.s32.totalorder %s202, %s204
    %p208 = scmp.eq.s32.totalorder %s16, 0
    %p209 = por %p207, %p208
    %p210 = scmp.ne.s32.totalorder %s202, %s204
    %p211 = scmp.eq.s32.totalorder %s21, 1
    %p212 = por %p210, %p211
    %p213 = scmp.ne.s32.totalorder %s204, %s205
    %p214 = scmp.eq.s32.totalorder %s21, 0
    %p215 = por %p213, %p214
    %p216 = scmp.ne.s32.totalorder %s204, %s205
    %p217 = scmp.eq.s32.totalorder %s22, 1
    %p218 = por %p216, %p217
    %p220 = scmp.ne.s32.totalorder %s205, %s219
    %p221 = scmp.eq.s32.totalorder %s22, 0
    %p222 = por %p220, %p221
    %s224 = sadd.s32 %s223, 1
    %p227 = scmp.eq.s32.totalorder %s16, 1
    %p228 = scmp.ne.s32.totalorder %s223, %s225
    %p229 = scmp.eq.s32.totalorder %s16, 0
    %p230 = por %p228, %p229
    %p231 = scmp.ne.s32.totalorder %s223, %s225
    %p232 = scmp.eq.s32.totalorder %s21, 1
    %p233 = por %p231, %p232
    %p234 = scmp.ne.s32.totalorder %s225, %s226
    %p235 = scmp.eq.s32.totalorder %s21, 0
    %p236 = por %p234, %p235
    %p237 = scmp.ne.s32.totalorder %s225, %s226
    %p238 = scmp.eq.s32.totalorder %s22, 1
    %p239 = por %p237, %p238
    %p241 = scmp.ne.s32.totalorder %s226, %s240
    %p242 = scmp.eq.s32.totalorder %s22, 0
    %p243 = por %p241, %p242
    %s244 = ssub.s32 %s16, %s23
    %p245 = scmp.eq.s32.totalorder %s244, 0
    %s247 = sadd.s32 %s246, 1
    %s248 = scalar_select %p245, %s246, %s247
    %p251 = pneg %p245
    %p252 = scmp.eq.s32.totalorder %s16, 1
    %p253 = por %p251, %p252
    %p254 = scmp.ne.s32.totalorder %s246, %s249
    %p255 = scmp.eq.s32.totalorder %s16, 0
    %p256 = por %p254, %p255
    %p257 = scmp.ne.s32.totalorder %s246, %s249
    %p258 = scmp.eq.s32.totalorder %s21, 1
    %p259 = por %p257, %p258
    %p260 = scmp.ne.s32.totalorder %s249, %s250
    %p261 = scmp.eq.s32.totalorder %s21, 0
    %p262 = por %p260, %p261
    %p263 = scmp.ne.s32.totalorder %s249, %s250
    %p264 = scmp.eq.s32.totalorder %s22, 1
    %p265 = por %p263, %p264
    %p267 = scmp.ne.s32.totalorder %s250, %s266
    %p268 = scmp.eq.s32.totalorder %s22, 0
    %p269 = por %p267, %p268
    %p270 = scmp.le.s32.totalorder 1, %s16
    %p271 = scmp.lt.s32.totalorder %s16, 3
    %p272 = pnand %p270, %p271
    %p273 = pneg %p272
    // Predicated region
    $region9: #{tpu_custom_call.1} parent=5 // pred_check
      _
    $region10: #{tpu_custom_call.1} parent=5 // pred_check_branch
      %275 = sbr.rel (%p272) target = $region12
    $region11: #{tpu_custom_call.1} parent=5 // pred_region
      %s276 = ssub.s32 %s16, 1
      // Predicated region
      $region13: #{tpu_custom_call.1} parent=11 // pred_check
        %p277 = pneg %p89
      $region14: #{tpu_custom_call.1} parent=11 // pred_check_branch
        %279 = sbr.rel (%p277) target = $region16
      $region15: #{tpu_custom_call.1} parent=11 // pred_region
        _
      $region16: #{tpu_custom_call.1} parent=11 // pred_fallthru
        _
      // Predicated region
      $region17: #{tpu_custom_call.1} parent=11 // pred_check
        %p280 = pneg %p110
      $region18: #{tpu_custom_call.1} parent=11 // pred_check_branch
        %282 = sbr.rel (%p280) target = $region20
      $region19: #{tpu_custom_call.1} parent=11 // pred_region
        _
      $region20: #{tpu_custom_call.1} parent=11 // pred_fallthru
        _
      // Predicated region
      $region21: #{tpu_custom_call.1} parent=11 // pred_check
        %p283 = pneg %p131
      $region22: #{tpu_custom_call.1} parent=11 // pred_check_branch
        %285 = sbr.rel (%p283) target = $region24
      $region23: #{tpu_custom_call.1} parent=11 // pred_region
        _
      $region24: #{tpu_custom_call.1} parent=11 // pred_fallthru
        _
      // Predicated region
      $region25: #{tpu_custom_call.1} parent=11 // pred_check
        %p286 = pneg %p152
      $region26: #{tpu_custom_call.1} parent=11 // pred_check_branch
        %288 = sbr.rel (%p286) target = $region28
      $region27: #{tpu_custom_call.1} parent=11 // pred_region
        _
      $region28: #{tpu_custom_call.1} parent=11 // pred_fallthru
        _
      // Predicated region
      $region29: #{tpu_custom_call.1} parent=11 // pred_check
        %p289 = pneg %p173
      $region30: #{tpu_custom_call.1} parent=11 // pred_check_branch
        %291 = sbr.rel (%p289) target = $region32
      $region31: #{tpu_custom_call.1} parent=11 // pred_region
        _
      $region32: #{tpu_custom_call.1} parent=11 // pred_fallthru
        _
      // Predicated region
      $region33: #{tpu_custom_call.1} parent=11 // pred_check
        %p292 = pneg %p194
      $region34: #{tpu_custom_call.1} parent=11 // pred_check_branch
        %294 = sbr.rel (%p292) target = $region36
      $region35: #{tpu_custom_call.1} parent=11 // pred_region
        _
      $region36: #{tpu_custom_call.1} parent=11 // pred_fallthru
        _
      // Predicated region
      $region37: #{tpu_custom_call.1} parent=11 // pred_check
        %p295 = pneg %p215
      $region38: #{tpu_custom_call.1} parent=11 // pred_check_branch
        %297 = sbr.rel (%p295) target = $region40
      $region39: #{tpu_custom_call.1} parent=11 // pred_region
        _
      $region40: #{tpu_custom_call.1} parent=11 // pred_fallthru
        _
      // Predicated region
      $region41: #{tpu_custom_call.1} parent=11 // pred_check
        %p298 = pneg %p236
      $region42: #{tpu_custom_call.1} parent=11 // pred_check_branch
        %300 = sbr.rel (%p298) target = $region44
      $region43: #{tpu_custom_call.1} parent=11 // pred_region
        _
      $region44: #{tpu_custom_call.1} parent=11 // pred_fallthru
        _
    $region12: #{tpu_custom_call.1} parent=5 // pred_fallthru
      _
    %p301 = scmp.lt.s32.totalorder %s16, 2
    // Predicated region
    $region45: #{tpu_custom_call.1} parent=5 // pred_check
      %p302 = pneg %p301
    $region46: #{tpu_custom_call.1} parent=5 // pred_check_branch
      %304 = sbr.rel (%p302) target = $region48
    $region47: #{tpu_custom_call.1} parent=5 // pred_region
      // Predicated region
      $region49: #{tpu_custom_call.1} parent=47 // pred_check
        %p305 = pneg %p36
      $region50: #{tpu_custom_call.1} parent=47 // pred_check_branch
        %307 = sbr.rel (%p305) target = $region52
      $region51: #{tpu_custom_call.1} parent=47 // pred_region
        %s308 = smul.u32 3, %s16
        %p309 = scmp.lt.s32.totalorder %s308, 5
        %s310 = scalar_select %p309, %s308, 5
        %s311 = smul.addr %s310, 2
        %s312 = smul.addr %s311, 4
        %s313 = scalar_lea.vmem %s0, %s312
        %s314 = smul.u32 3, %s16
      $region52: #{tpu_custom_call.1} parent=47 // pred_fallthru
        _
      // Predicated region
      $region53: #{tpu_custom_call.1} parent=47 // pred_check
        %p315 = pneg %p62
      $region54: #{tpu_custom_call.1} parent=47 // pred_check_branch
        %317 = sbr.rel (%p315) target = $region56
      $region55: #{tpu_custom_call.1} parent=47 // pred_region
        %s318 = smul.u32 6, %s16
        %p319 = scmp.lt.s32.totalorder %s318, 11
        %s320 = scalar_select %p319, %s318, 11
        %s321 = smul.addr %s320, 8
        %s322 = scalar_lea.vmem %s1, %s321
        %s323 = smul.u32 6, %s16
      $region56: #{tpu_custom_call.1} parent=47 // pred_fallthru
        _
    $region48: #{tpu_custom_call.1} parent=5 // pred_fallthru
      _
    %p324 = scmp.le.s32.totalorder 1, %s16
    %p325 = scmp.lt.s32.totalorder %s16, 3
    %p326 = pnand %p324, %p325
    %p327 = pneg %p326
    // Predicated region
    $region57: #{tpu_custom_call.1} parent=5 // pred_check
      _
    $region58: #{tpu_custom_call.1} parent=5 // pred_check_branch
      %329 = sbr.rel (%p326) target = $region60
    $region59: #{tpu_custom_call.1} parent=5 // pred_region
      %s330 = ssub.s32 %s16, 1
      %s331 = smul.u32 3, %s21
      %p332 = scmp.lt.s32.totalorder %s331, 5
      %s333 = scalar_select %p332, %s331, 5
      %s334 = smul.addr %s333, 2
      %s335 = smul.addr %s334, 4
      %s336 = scalar_lea.vmem %s0, %s335
      %p337 = pneg %p42
      %p338 = pneg %p39
      %s339 = smul.u32 6, %s21
      %p340 = scmp.lt.s32.totalorder %s339, 11
      %s341 = scalar_select %p340, %s339, 11
      %s342 = smul.addr %s341, 8
      %s343 = scalar_lea.vmem %s1, %s342
      %p344 = pneg %p68
      %p345 = pneg %p65
      %p346 = pneg %p89
      %p347 = pneg %p86
      %p348 = pneg %p110
      %p349 = pneg %p107
      %p350 = pneg %p131
      %p351 = pneg %p128
      %p352 = pneg %p152
      %p353 = pneg %p149
      %p354 = pneg %p173
      %p355 = pneg %p170
      %p356 = pneg %p194
      %p357 = pneg %p191
      %p358 = pneg %p215
      %p359 = pneg %p212
      %p360 = pneg %p236
      %p361 = pneg %p233
      %p362 = pneg %p262
      %p363 = pneg %p259
      %s364 = smul.u32 3, %s21
      %p365 = scmp.lt.s32.totalorder %s364, 5
      %s366 = scalar_select %p365, %s364, 5
      %s367 = smul.addr %s366, 2
      %s368 = smul.addr %s367, 8
      %s369 = scalar_lea.vmem %s10, %s368
      %s370 = smul.u32 3, %s21
      %p371 = scmp.lt.s32.totalorder %s370, 5
      %s372 = scalar_select %p371, %s370, 5
      %s373 = smul.addr %s372, 2
      %s374 = smul.addr %s373, 4
      %s375 = scalar_lea.vmem %s0, %s374
      %s376 = smul.u32 3, %s21
      %s377 = smul.u32 6, %s21
      %p378 = scmp.lt.s32.totalorder %s377, 11
      %s379 = scalar_select %p378, %s377, 11
      %s380 = smul.addr %s379, 8
      %s381 = scalar_lea.vmem %s1, %s380
      %s382 = smul.u32 6, %s21
      %s383 = smul.u32 3, %s21
      %p384 = scmp.lt.s32.totalorder %s383, 5
      %s385 = scalar_select %p384, %s383, 5
      %s386 = smul.addr %s385, 2
      %s387 = smul.addr %s386, 8
      %s388 = scalar_lea.vmem %s10, %s387
      %s389 = smul.u32 3, %s21
      %v391 = vld [vmem:[%s375] sm:$0xf]
      %v392 = vld [vmem:[%s375 + $0x4] sm:$0xf]
      %v393 = vld [vmem:[%s375 + $0x8] sm:$0xf]
      %v394 = vld [vmem:[%s375 + $0xc] sm:$0xf]
      %v395 = vld [vmem:[%s375 + $0x10] sm:$0xf]
      %v396 = vld [vmem:[%s375 + $0x14] sm:$0xf]
      %v397 = vld [vmem:[%s381] sm:$0xff]
      %v398 = vld [vmem:[%s381 + $0x8] sm:$0xff]
      %v399 = vld [vmem:[%s381 + $0x10] sm:$0xff]
      %v400 = vld [vmem:[%s381 + $0x18] sm:$0xff]
      %v401 = vld [vmem:[%s381 + $0x20] sm:$0xff]
      %v402 = vld [vmem:[%s381 + $0x28] sm:$0xff]
      %v403 = vld [vmem:[%s2] sm:$0xf]
      %v404 = vld [vmem:[%s2 + $0x4] sm:$0xf]
      %v405 = vld [vmem:[%s2 + $0x8] sm:$0xf]
      %v406 = vld [vmem:[%s2 + $0xc] sm:$0xf]
      %v407 = vld [vmem:[%s2 + $0x10] sm:$0xf]
      %v408 = vld [vmem:[%s2 + $0x14] sm:$0xf]
      %v409 = vld [vmem:[%s2 + $0x18] sm:$0xf]
      %v410 = vld [vmem:[%s2 + $0x1c] sm:$0xf]
      %v411 = vld [vmem:[%s2 + $0x20] sm:$0xf]
      %v412 = vld [vmem:[%s2 + $0x24] sm:$0xf]
      %v413 = vld [vmem:[%s2 + $0x28] sm:$0xf]
      %v414 = vld [vmem:[%s2 + $0x2c] sm:$0xf]
      %v415 = vld [vmem:[%s2 + $0x30] sm:$0xf]
      %v416 = vld [vmem:[%s2 + $0x34] sm:$0xf]
      %v417 = vld [vmem:[%s2 + $0x38] sm:$0xf]
      %v418 = vld [vmem:[%s2 + $0x3c] sm:$0xf]
      %v419 = vld [vmem:[%s3] sm:$0x1]
      %v421 = vlaneseq
      %v422 = vshrl.u32 %v421, 7
      %v423 = vsub.s32 0, %v422
      %v424 = vrot.slane %v419, %v423
      %v432 = vunpack.c.l.b16 %v391
      %v433 = vunpack.c.l.b16 %v392
      %v434 = vunpack.c.l.b16 %v393
      %v435 = vunpack.c.l.b16 %v394
      %v436 = vunpack.c.l.b16 %v395
      %v437 = vunpack.c.l.b16 %v396
      %v438 = vpack.c.b16 %v433, %v432
      %v439 = vpack.c.b16 %v435, %v434
      %v440 = vpack.c.b16 %v437, %v436
      %v460 = vunpack.c.l.b16 %v403
      %v461 = vunpack.c.l.b16 %v404
      %v462 = vunpack.c.l.b16 %v405
      %v463 = vunpack.c.l.b16 %v406
      %v464 = vunpack.c.l.b16 %v407
      %v465 = vunpack.c.l.b16 %v408
      %v466 = vunpack.c.l.b16 %v409
      %v467 = vunpack.c.l.b16 %v410
      %v468 = vunpack.c.l.b16 %v411
      %v469 = vunpack.c.l.b16 %v412
      %v470 = vunpack.c.l.b16 %v413
      %v471 = vunpack.c.l.b16 %v414
      %v472 = vunpack.c.l.b16 %v415
      %v473 = vunpack.c.l.b16 %v416
      %v474 = vunpack.c.l.b16 %v417
      %v475 = vunpack.c.l.b16 %v418
      %v476 = vpack.c.b16 %v461, %v460
      %v477 = vpack.c.b16 %v463, %v462
      %v478 = vpack.c.b16 %v465, %v464
      %v479 = vpack.c.b16 %v467, %v466
      %v480 = vpack.c.b16 %v469, %v468
      %v481 = vpack.c.b16 %v471, %v470
      %v482 = vpack.c.b16 %v473, %v472
      %v483 = vpack.c.b16 %v475, %v474
      %492 = vmatprep.subr.bf16.mxu0 0
      %493 = vmatpush1.bf16.msra.mxu0 %v483
      %494 = vmatprep.subr.bf16.mxu0 0
      %495 = vmatpush1.bf16.msra.mxu0 %v482
      %496 = vmatprep.subr.bf16.mxu0 0
      %497 = vmatpush1.bf16.msra.mxu0 %v481
      %498 = vmatprep.subr.bf16.mxu0 0
      %499 = vmatpush1.bf16.msra.mxu0 %v480
      %500 = vmatprep.subr.bf16.mxu0 0
      %501 = vmatpush1.bf16.msra.mxu0 %v479
      %502 = vmatprep.subr.bf16.mxu0 0
      %503 = vmatpush1.bf16.msra.mxu0 %v478
      %504 = vmatprep.subr.bf16.mxu0 0
      %505 = vmatpush1.bf16.msra.mxu0 %v477
      %506 = vmatprep.subr.bf16.mxu0 0
      %507 = vmatpush1.bf16.msra.mxu0 %v476
      %508 = vmatprep.subr.bf16.mxu0 0
      %509 = vmatpush2.bf16.msra.mxu0 0
      %510 = vmatprep.subr.bf16.mxu0 0
      %511 = vmatpush2.bf16.msra.mxu0 0
      %512 = vmatprep.subr.bf16.mxu0 0
      %513 = vmatpush2.bf16.msra.mxu0 0
      %514 = vmatprep.subr.bf16.mxu0 0
      %515 = vmatpush2.bf16.msra.mxu0 0
      %516 = vmatprep.subr.bf16.mxu0 0
      %517 = vmatpush2.bf16.msra.mxu0 0
      %518 = vmatprep.subr.bf16.mxu0 0
      %519 = vmatpush2.bf16.msra.mxu0 0
      %520 = vmatprep.subr.bf16.mxu0 0
      %521 = vmatpush2.bf16.msra.mxu0 0
      %522 = vmatprep.subr.bf16.mxu0 0
      %523 = vmatpush2.bf16.msra.mxu0 0
      %524 = vmatprep.mubr.bf16.mxu0 0
      %525 = vmatmul.mubr.bf16.gmra.mxu0 %v438
      %v526 = vpop.f32.mrf.mxu0
      %v527 = vadd.f32 %v424, %v526
      %v528 = vpop.f32.mrf.mxu0
      %v529 = vpop.f32.mrf.mxu0
      %v530 = vadd.f32 %v424, %v529
      %v531 = vpop.f32.mrf.mxu0
      %532 = vmatprep.mubr.bf16.mxu0 0
      %533 = vmatmul.mubr.bf16.gmra.mxu0 %v439
      %v534 = vpop.f32.mrf.mxu0
      %v535 = vadd.f32 %v424, %v534
      %v536 = vpop.f32.mrf.mxu0
      %v537 = vpop.f32.mrf.mxu0
      %v538 = vadd.f32 %v424, %v537
      %v539 = vpop.f32.mrf.mxu0
      %540 = vmatprep.mubr.bf16.mxu0 0
      %541 = vmatmul.mubr.bf16.gmra.mxu0 %v440
      %v542 = vpop.f32.mrf.mxu0
      %v543 = vadd.f32 %v424, %v542
      %v544 = vpop.f32.mrf.mxu0
      %v545 = vpop.f32.mrf.mxu0
      %v546 = vadd.f32 %v424, %v545
      %v547 = vpop.f32.mrf.mxu0
      %548 = vdwg.mxu0
      %v549 = vmax.f32 %v527, 0.0
      %v550 = vmax.f32 %v530, 0.0
      %v551 = vmax.f32 %v535, 0.0
      %v552 = vmax.f32 %v538, 0.0
      %v553 = vmax.f32 %v543, 0.0
      %v554 = vmax.f32 %v546, 0.0
      %v555 = vpack.c.bf16 %v550, %v549
      %v556 = vpack.c.bf16 %v552, %v551
      %v557 = vpack.c.bf16 %v554, %v553
      %v558 = vld [vmem:[%s4] sm:$0xff]
      %v559 = vld [vmem:[%s4 + $0x8] sm:$0xff]
      %v560 = vld [vmem:[%s4 + $0x10] sm:$0xff]
      %v561 = vld [vmem:[%s4 + $0x18] sm:$0xff]
      %v562 = vld [vmem:[%s5] sm:$0x3]
      %v564 = vlaneseq
      %v565 = vshrl.u32 %v564, 7
      %v566 = vsub.s32 0, %v565
      %v567 = vrot.slane %v562, %v566
      %v568 = vlaneseq
      %v569 = vshrl.u32 %v568, 7
      %v570 = vsub.s32 1, %v569
      %v571 = vrot.slane %v562, %v570
      %v578 = vunpack.c.l.b16 %v558
      %v579 = vunpack.c.h.b16 %v558
      %v580 = vunpack.c.l.b16 %v559
      %v581 = vunpack.c.h.b16 %v559
      %v582 = vunpack.c.l.b16 %v560
      %v583 = vunpack.c.h.b16 %v560
      %v584 = vunpack.c.l.b16 %v561
      %v585 = vunpack.c.h.b16 %v561
      %v586 = vpack.c.b16 %v580, %v578
      %v587 = vpack.c.b16 %v581, %v579
      %v588 = vpack.c.b16 %v584, %v582
      %v589 = vpack.c.b16 %v585, %v583
      %vm594 = vcmask 261120
      %v596 = vsel %vm594, %v555, 0
      %v599 = vsel %vm594, %v556, 0
      %v602 = vsel %vm594, %v557, 0
      %604 = vmatprep.subr.bf16.mxu0 0
      %605 = vmatpush1.bf16.msra.mxu0 0
      %606 = vmatprep.subr.bf16.mxu0 0
      %607 = vmatpush1.bf16.msra.mxu0 0
      %608 = vmatprep.subr.bf16.mxu0 0
      %609 = vmatpush1.bf16.msra.mxu0 0
      %610 = vmatprep.subr.bf16.mxu0 0
      %611 = vmatpush1.bf16.msra.mxu0 0
      %612 = vmatprep.subr.bf16.mxu0 0
      %613 = vmatpush1.bf16.msra.mxu0 0
      %614 = vmatprep.subr.bf16.mxu0 0
      %615 = vmatpush1.bf16.msra.mxu0 0
      %616 = vmatprep.subr.bf16.mxu0 %v589
      %617 = vmatpush1.bf16.msra.mxu0 %v588
      %618 = vmatprep.subr.bf16.mxu0 %v587
      %619 = vmatpush1.bf16.msra.mxu0 %v586
      %620 = vmatprep.subr.bf16.mxu0 0
      %621 = vmatpush2.bf16.msra.mxu0 0
      %622 = vmatprep.subr.bf16.mxu0 0
      %623 = vmatpush2.bf16.msra.mxu0 0
      %624 = vmatprep.subr.bf16.mxu0 0
      %625 = vmatpush2.bf16.msra.mxu0 0
      %626 = vmatprep.subr.bf16.mxu0 0
      %627 = vmatpush2.bf16.msra.mxu0 0
      %628 = vmatprep.subr.bf16.mxu0 0
      %629 = vmatpush2.bf16.msra.mxu0 0
      %630 = vmatprep.subr.bf16.mxu0 0
      %631 = vmatpush2.bf16.msra.mxu0 0
      %632 = vmatprep.subr.bf16.mxu0 0
      %633 = vmatpush2.bf16.msra.mxu0 0
      %634 = vmatprep.subr.bf16.mxu0 0
      %635 = vmatpush2.bf16.msra.mxu0 0
      %636 = vmatprep.mubr.bf16.mxu0 0
      %637 = vmatmul.mubr.bf16.gmra.mxu0 %v596
      %v638 = vpop.f32.mrf.mxu0
      %v639 = vadd.f32 %v567, %v638
      %v640 = vpop.f32.mrf.mxu0
      %v641 = vadd.f32 %v571, %v640
      %v642 = vpop.f32.mrf.mxu0
      %v643 = vadd.f32 %v567, %v642
      %v644 = vpop.f32.mrf.mxu0
      %v645 = vadd.f32 %v571, %v644
      %646 = vmatprep.mubr.bf16.mxu0 0
      %647 = vmatmul.mubr.bf16.gmra.mxu0 %v599
      %v648 = vpop.f32.mrf.mxu0
      %v649 = vadd.f32 %v567, %v648
      %v650 = vpop.f32.mrf.mxu0
      %v651 = vadd.f32 %v571, %v650
      %v652 = vpop.f32.mrf.mxu0
      %v653 = vadd.f32 %v567, %v652
      %v654 = vpop.f32.mrf.mxu0
      %v655 = vadd.f32 %v571, %v654
      %656 = vmatprep.mubr.bf16.mxu0 0
      %657 = vmatmul.mubr.bf16.gmra.mxu0 %v602
      %v658 = vpop.f32.mrf.mxu0
      %v659 = vadd.f32 %v567, %v658
      %v660 = vpop.f32.mrf.mxu0
      %v661 = vadd.f32 %v571, %v660
      %v662 = vpop.f32.mrf.mxu0
      %v663 = vadd.f32 %v567, %v662
      %v664 = vpop.f32.mrf.mxu0
      %v665 = vadd.f32 %v571, %v664
      %666 = vdwg.mxu0
      %v667 = vmax.f32 %v639, 0.0
      %v668 = vmax.f32 %v641, 0.0
      %v669 = vmax.f32 %v643, 0.0
      %v670 = vmax.f32 %v645, 0.0
      %v671 = vmax.f32 %v649, 0.0
      %v672 = vmax.f32 %v651, 0.0
      %v673 = vmax.f32 %v653, 0.0
      %v674 = vmax.f32 %v655, 0.0
      %v675 = vmax.f32 %v659, 0.0
      %v676 = vmax.f32 %v661, 0.0
      %v677 = vmax.f32 %v663, 0.0
      %v678 = vmax.f32 %v665, 0.0
      %v679 = vpack.c.bf16 %v669, %v667
      %v680 = vpack.c.bf16 %v670, %v668
      %v681 = vpack.c.bf16 %v673, %v671
      %v682 = vpack.c.bf16 %v674, %v672
      %v683 = vpack.c.bf16 %v677, %v675
      %v684 = vpack.c.bf16 %v678, %v676
      %v685 = vld [vmem:[%s6] sm:$0xf]
      %v686 = vld [vmem:[%s6 + $0x4] sm:$0xf]
      %v687 = vld [vmem:[%s6 + $0x8] sm:$0xf]
      %v688 = vld [vmem:[%s6 + $0xc] sm:$0xf]
      %v689 = vld [vmem:[%s6 + $0x10] sm:$0xf]
      %v690 = vld [vmem:[%s6 + $0x14] sm:$0xf]
      %v691 = vld [vmem:[%s6 + $0x18] sm:$0xf]
      %v692 = vld [vmem:[%s6 + $0x1c] sm:$0xf]
      %v693 = vld [vmem:[%s6 + $0x20] sm:$0xf]
      %v694 = vld [vmem:[%s6 + $0x24] sm:$0xf]
      %v695 = vld [vmem:[%s6 + $0x28] sm:$0xf]
      %v696 = vld [vmem:[%s6 + $0x2c] sm:$0xf]
      %v697 = vld [vmem:[%s6 + $0x30] sm:$0xf]
      %v698 = vld [vmem:[%s6 + $0x34] sm:$0xf]
      %v699 = vld [vmem:[%s6 + $0x38] sm:$0xf]
      %v700 = vld [vmem:[%s6 + $0x3c] sm:$0xf]
      %v701 = vld [vmem:[%s6 + $0x40] sm:$0xf]
      %v702 = vld [vmem:[%s6 + $0x44] sm:$0xf]
      %v703 = vld [vmem:[%s6 + $0x48] sm:$0xf]
      %v704 = vld [vmem:[%s6 + $0x4c] sm:$0xf]
      %v705 = vld [vmem:[%s6 + $0x50] sm:$0xf]
      %v706 = vld [vmem:[%s6 + $0x54] sm:$0xf]
      %v707 = vld [vmem:[%s6 + $0x58] sm:$0xf]
      %v708 = vld [vmem:[%s6 + $0x5c] sm:$0xf]
      %v709 = vld [vmem:[%s6 + $0x60] sm:$0xf]
      %v710 = vld [vmem:[%s6 + $0x64] sm:$0xf]
      %v711 = vld [vmem:[%s6 + $0x68] sm:$0xf]
      %v712 = vld [vmem:[%s6 + $0x6c] sm:$0xf]
      %v713 = vld [vmem:[%s6 + $0x70] sm:$0xf]
      %v714 = vld [vmem:[%s6 + $0x74] sm:$0xf]
      %v715 = vld [vmem:[%s6 + $0x78] sm:$0xf]
      %v716 = vld [vmem:[%s6 + $0x7c] sm:$0xf]
      %v717 = vld [vmem:[%s7] sm:$0x1]
      %v719 = vlaneseq
      %v720 = vshrl.u32 %v719, 7
      %v721 = vsub.s32 0, %v720
      %v722 = vrot.slane %v717, %v721
      %v756 = vunpack.c.l.b16 %v685
      %v757 = vunpack.c.l.b16 %v686
      %v758 = vunpack.c.l.b16 %v687
      %v759 = vunpack.c.l.b16 %v688
      %v760 = vunpack.c.l.b16 %v689
      %v761 = vunpack.c.l.b16 %v690
      %v762 = vunpack.c.l.b16 %v691
      %v763 = vunpack.c.l.b16 %v692
      %v764 = vunpack.c.l.b16 %v693
      %v765 = vunpack.c.l.b16 %v694
      %v766 = vunpack.c.l.b16 %v695
      %v767 = vunpack.c.l.b16 %v696
      %v768 = vunpack.c.l.b16 %v697
      %v769 = vunpack.c.l.b16 %v698
      %v770 = vunpack.c.l.b16 %v699
      %v771 = vunpack.c.l.b16 %v700
      %v772 = vunpack.c.l.b16 %v701
      %v773 = vunpack.c.l.b16 %v702
      %v774 = vunpack.c.l.b16 %v703
      %v775 = vunpack.c.l.b16 %v704
      %v776 = vunpack.c.l.b16 %v705
      %v777 = vunpack.c.l.b16 %v706
      %v778 = vunpack.c.l.b16 %v707
      %v779 = vunpack.c.l.b16 %v708
      %v780 = vunpack.c.l.b16 %v709
      %v781 = vunpack.c.l.b16 %v710
      %v782 = vunpack.c.l.b16 %v711
      %v783 = vunpack.c.l.b16 %v712
      %v784 = vunpack.c.l.b16 %v713
      %v785 = vunpack.c.l.b16 %v714
      %v786 = vunpack.c.l.b16 %v715
      %v787 = vunpack.c.l.b16 %v716
      %v788 = vpack.c.b16 %v757, %v756
      %v789 = vpack.c.b16 %v759, %v758
      %v790 = vpack.c.b16 %v761, %v760
      %v791 = vpack.c.b16 %v763, %v762
      %v792 = vpack.c.b16 %v765, %v764
      %v793 = vpack.c.b16 %v767, %v766
      %v794 = vpack.c.b16 %v769, %v768
      %v795 = vpack.c.b16 %v771, %v770
      %v796 = vpack.c.b16 %v773, %v772
      %v797 = vpack.c.b16 %v775, %v774
      %v798 = vpack.c.b16 %v777, %v776
      %v799 = vpack.c.b16 %v779, %v778
      %v800 = vpack.c.b16 %v781, %v780
      %v801 = vpack.c.b16 %v783, %v782
      %v802 = vpack.c.b16 %v785, %v784
      %v803 = vpack.c.b16 %v787, %v786
      %820 = vmatprep.subr.bf16.mxu0 0
      %821 = vmatpush1.bf16.msra.mxu0 %v795
      %822 = vmatprep.subr.bf16.mxu0 0
      %823 = vmatpush1.bf16.msra.mxu0 %v794
      %824 = vmatprep.subr.bf16.mxu0 0
      %825 = vmatpush1.bf16.msra.mxu0 %v793
      %826 = vmatprep.subr.bf16.mxu0 0
      %827 = vmatpush1.bf16.msra.mxu0 %v792
      %828 = vmatprep.subr.bf16.mxu0 0
      %829 = vmatpush1.bf16.msra.mxu0 %v791
      %830 = vmatprep.subr.bf16.mxu0 0
      %831 = vmatpush1.bf16.msra.mxu0 %v790
      %832 = vmatprep.subr.bf16.mxu0 0
      %833 = vmatpush1.bf16.msra.mxu0 %v789
      %834 = vmatprep.subr.bf16.mxu0 0
      %835 = vmatpush1.bf16.msra.mxu0 %v788
      %836 = vmatprep.subr.bf16.mxu0 0
      %837 = vmatpush2.bf16.msra.mxu0 %v803
      %838 = vmatprep.subr.bf16.mxu0 0
      %839 = vmatpush2.bf16.msra.mxu0 %v802
      %840 = vmatprep.subr.bf16.mxu0 0
      %841 = vmatpush2.bf16.msra.mxu0 %v801
      %842 = vmatprep.subr.bf16.mxu0 0
      %843 = vmatpush2.bf16.msra.mxu0 %v800
      %844 = vmatprep.subr.bf16.mxu0 0
      %845 = vmatpush2.bf16.msra.mxu0 %v799
      %846 = vmatprep.subr.bf16.mxu0 0
      %847 = vmatpush2.bf16.msra.mxu0 %v798
      %848 = vmatprep.subr.bf16.mxu0 0
      %849 = vmatpush2.bf16.msra.mxu0 %v797
      %850 = vmatprep.subr.bf16.mxu0 0
      %851 = vmatpush2.bf16.msra.mxu0 %v796
      %852 = vmatprep.mubr.bf16.mxu0 %v680
      %853 = vmatmul.mubr.bf16.gmra.mxu0 %v679
      %v854 = vpop.f32.mrf.mxu0
      %v855 = vadd.f32 %v722, %v854
      %v856 = vpop.f32.mrf.mxu0
      %v857 = vpop.f32.mrf.mxu0
      %v858 = vadd.f32 %v722, %v857
      %v859 = vpop.f32.mrf.mxu0
      %860 = vmatprep.mubr.bf16.mxu0 %v682
      %861 = vmatmul.mubr.bf16.gmra.mxu0 %v681
      %v862 = vpop.f32.mrf.mxu0
      %v863 = vadd.f32 %v722, %v862
      %v864 = vpop.f32.mrf.mxu0
      %v865 = vpop.f32.mrf.mxu0
      %v866 = vadd.f32 %v722, %v865
      %v867 = vpop.f32.mrf.mxu0
      %868 = vmatprep.mubr.bf16.mxu0 %v684
      %869 = vmatmul.mubr.bf16.gmra.mxu0 %v683
      %v870 = vpop.f32.mrf.mxu0
      %v871 = vadd.f32 %v722, %v870
      %v872 = vpop.f32.mrf.mxu0
      %v873 = vpop.f32.mrf.mxu0
      %v874 = vadd.f32 %v722, %v873
      %v875 = vpop.f32.mrf.mxu0
      %876 = vdwg.mxu0
      %878 = vset.pattern.permute.xlu0 0
      %879 = vperm.xlu0 %878, %v397
      %v880 = vpop.permute.xlu0 %879
      %883 = vset.pattern.permute.xlu0 0
      %884 = vperm.xlu0 %883, %v398
      %v885 = vpop.permute.xlu0 %884
      %888 = vset.pattern.permute.xlu0 0
      %889 = vperm.xlu0 %888, %v399
      %v890 = vpop.permute.xlu0 %889
      %893 = vset.pattern.permute.xlu0 0
      %894 = vperm.xlu0 %893, %v400
      %v895 = vpop.permute.xlu0 %894
      %898 = vset.pattern.permute.xlu0 0
      %899 = vperm.xlu0 %898, %v401
      %v900 = vpop.permute.xlu0 %899
      %903 = vset.pattern.permute.xlu0 0
      %904 = vperm.xlu0 %903, %v402
      %v905 = vpop.permute.xlu0 %904
      %v907 = vmul.f32 %v855, %v880
      %v908 = vmul.f32 %v858, %v885
      %v909 = vmul.f32 %v863, %v890
      %v910 = vmul.f32 %v866, %v895
      %v911 = vmul.f32 %v871, %v900
      %v912 = vmul.f32 %v874, %v905
      %v913 = vld [vmem:[%s8] sm:$0xff]
      %v914 = vld [vmem:[%s8 + $0x8] sm:$0xff]
      %v915 = vld [vmem:[%s8 + $0x10] sm:$0xff]
      %v916 = vld [vmem:[%s8 + $0x18] sm:$0xff]
      %v917 = vld [vmem:[%s8 + $0x20] sm:$0xff]
      %v918 = vld [vmem:[%s8 + $0x28] sm:$0xff]
      %v919 = vld [vmem:[%s8 + $0x30] sm:$0xff]
      %v920 = vld [vmem:[%s8 + $0x38] sm:$0xff]
      %vm921 = vcmask 523264
      %v923 = vsel %vm921, %v907, 0
      %v926 = vsel %vm921, %v908, 0
      %v929 = vsel %vm921, %v909, 0
      %v932 = vsel %vm921, %v910, 0
      %v935 = vsel %vm921, %v911, 0
      %v938 = vsel %vm921, %v912, 0
      %940 = vmatprep.subr.mxu0 0.0
      %941 = vmatpush1.msra.mxu0 0.0
      %942 = vmatprep.subr.mxu0 0.0
      %943 = vmatpush1.msra.mxu0 0.0
      %944 = vmatprep.subr.mxu0 0.0
      %945 = vmatpush1.msra.mxu0 0.0
      %946 = vmatprep.subr.mxu0 0.0
      %947 = vmatpush1.msra.mxu0 0.0
      %948 = vmatprep.subr.mxu0 0.0
      %949 = vmatpush1.msra.mxu0 0.0
      %950 = vmatprep.subr.mxu0 0.0
      %951 = vmatpush1.msra.mxu0 0.0
      %952 = vmatprep.subr.mxu0 0.0
      %953 = vmatpush1.msra.mxu0 0.0
      %954 = vmatprep.subr.mxu0 0.0
      %955 = vmatpush1.msra.mxu0 0.0
      %956 = vmatprep.subr.mxu0 0.0
      %957 = vmatpush1.msra.mxu0 %v920
      %958 = vmatprep.subr.mxu0 0.0
      %959 = vmatpush1.msra.mxu0 %v919
      %960 = vmatprep.subr.mxu0 0.0
      %961 = vmatpush1.msra.mxu0 %v918
      %962 = vmatprep.subr.mxu0 0.0
      %963 = vmatpush1.msra.mxu0 %v917
      %964 = vmatprep.subr.mxu0 0.0
      %965 = vmatpush1.msra.mxu0 %v916
      %966 = vmatprep.subr.mxu0 0.0
      %967 = vmatpush1.msra.mxu0 %v915
      %968 = vmatprep.subr.mxu0 0.0
      %969 = vmatpush1.msra.mxu0 %v914
      %970 = vmatprep.subr.mxu0 0.0
      %971 = vmatpush1.msra.mxu0 %v913
      %972 = vmatprep.subr.mxu0 0.0
      %973 = vmatpush2.msra.mxu0 0.0
      %974 = vmatprep.subr.mxu0 0.0
      %975 = vmatpush2.msra.mxu0 0.0
      %976 = vmatprep.subr.mxu0 0.0
      %977 = vmatpush2.msra.mxu0 0.0
      %978 = vmatprep.subr.mxu0 0.0
      %979 = vmatpush2.msra.mxu0 0.0
      %980 = vmatprep.subr.mxu0 0.0
      %981 = vmatpush2.msra.mxu0 0.0
      %982 = vmatprep.subr.mxu0 0.0
      %983 = vmatpush2.msra.mxu0 0.0
      %984 = vmatprep.subr.mxu0 0.0
      %985 = vmatpush2.msra.mxu0 0.0
      %986 = vmatprep.subr.mxu0 0.0
      %987 = vmatpush2.msra.mxu0 0.0
      %988 = vmatprep.subr.mxu0 0.0
      %989 = vmatpush2.msra.mxu0 0.0
      %990 = vmatprep.subr.mxu0 0.0
      %991 = vmatpush2.msra.mxu0 0.0
      %992 = vmatprep.subr.mxu0 0.0
      %993 = vmatpush2.msra.mxu0 0.0
      %994 = vmatprep.subr.mxu0 0.0
      %995 = vmatpush2.msra.mxu0 0.0
      %996 = vmatprep.subr.mxu0 0.0
      %997 = vmatpush2.msra.mxu0 0.0
      %998 = vmatprep.subr.mxu0 0.0
      %999 = vmatpush2.msra.mxu0 0.0
      %1000 = vmatprep.subr.mxu0 0.0
      %1001 = vmatpush2.msra.mxu0 0.0
      %1002 = vmatprep.subr.mxu0 0.0
      %1003 = vmatpush2.msra.mxu0 0.0
      %1004 = vmatprep.mubr.f32.mxu0 0.0
      %1005 = vmatmul.mubr.f32.gmra.mxu0 %v923
      %v1006 = vpop.f32.mrf.mxu0
      %v1007 = vadd.f32 0.0, %v1006
      %v1008 = vpop.f32.mrf.mxu0
      %1009 = vmatprep.mubr.f32.mxu0 0.0
      %1010 = vmatmul.mubr.f32.gmra.mxu0 %v926
      %v1011 = vpop.f32.mrf.mxu0
      %v1012 = vadd.f32 0.0, %v1011
      %v1013 = vpop.f32.mrf.mxu0
      %1014 = vmatprep.mubr.f32.mxu0 0.0
      %1015 = vmatmul.mubr.f32.gmra.mxu0 %v929
      %v1016 = vpop.f32.mrf.mxu0
      %v1017 = vadd.f32 0.0, %v1016
      %v1018 = vpop.f32.mrf.mxu0
      %1019 = vmatprep.mubr.f32.mxu0 0.0
      %1020 = vmatmul.mubr.f32.gmra.mxu0 %v932
      %v1021 = vpop.f32.mrf.mxu0
      %v1022 = vadd.f32 0.0, %v1021
      %v1023 = vpop.f32.mrf.mxu0
      %1024 = vmatprep.mubr.f32.mxu0 0.0
      %1025 = vmatmul.mubr.f32.gmra.mxu0 %v935
      %v1026 = vpop.f32.mrf.mxu0
      %v1027 = vadd.f32 0.0, %v1026
      %v1028 = vpop.f32.mrf.mxu0
      %1029 = vmatprep.mubr.f32.mxu0 0.0
      %1030 = vmatmul.mubr.f32.gmra.mxu0 %v938
      %v1031 = vpop.f32.mrf.mxu0
      %v1032 = vadd.f32 0.0, %v1031
      %v1033 = vpop.f32.mrf.mxu0
      %1034 = vdwg.mxu0
      %v1035 = vld [vmem:[%s9] sm:$0x1]
      %v1037 = vlaneseq
      %v1038 = vshrl.u32 %v1037, 7
      %v1039 = vsub.s32 0, %v1038
      %v1040 = vrot.slane %v1035, %v1039
      %1041 = vrot.lane.b32.xlu0 %v1040, 4
      %v1042 = vpop.permute.xlu0 %1041
      %v1044 = vadd.f32 %v1007, %v1042
      %v1045 = vadd.f32 %v1012, %v1042
      %v1046 = vadd.f32 %v1017, %v1042
      %v1047 = vadd.f32 %v1022, %v1042
      %v1048 = vadd.f32 %v1027, %v1042
      %v1049 = vadd.f32 %v1032, %v1042
      %v1050 = vrot.slane %v1007, 6
      %v1051 = vrot.slane %v1012, 6
      %v1052 = vrot.slane %v1017, 6
      %v1053 = vrot.slane %v1022, 6
      %v1054 = vrot.slane %v1027, 6
      %v1055 = vrot.slane %v1032, 6
      %v1056 = vlaneseq
      %v1057 = vshrl.u32 %v1056, 7
      %vm1058 = vcmp.lt.s32.totalorder %v1057, 2
      %v1059 = vsel %vm1058, %v1054, %v1055
      %v1060 = vsel %vm1058, %v1053, %v1054
      %v1061 = vsel %vm1058, %v1052, %v1053
      %v1062 = vsel %vm1058, %v1051, %v1052
      %v1063 = vsel %vm1058, %v1050, %v1051
      %v1064 = vsel %vm1058, %v1055, %v1050
      %1065 = vset.pattern.permute.xlu0 6
      %1066 = vperm.xlu0 %1065, %v397
      %v1067 = vpop.permute.xlu0 %1066
      %1069 = vset.pattern.permute.xlu0 6
      %1070 = vperm.xlu0 %1069, %v398
      %v1071 = vpop.permute.xlu0 %1070
      %1073 = vset.pattern.permute.xlu0 6
      %1074 = vperm.xlu0 %1073, %v399
      %v1075 = vpop.permute.xlu0 %1074
      %1077 = vset.pattern.permute.xlu0 6
      %1078 = vperm.xlu0 %1077, %v400
      %v1079 = vpop.permute.xlu0 %1078
      %1081 = vset.pattern.permute.xlu0 6
      %1082 = vperm.xlu0 %1081, %v401
      %v1083 = vpop.permute.xlu0 %1082
      %1085 = vset.pattern.permute.xlu0 6
      %1086 = vperm.xlu0 %1085, %v402
      %v1087 = vpop.permute.xlu0 %1086
      %v1089 = vmul.f32 %v1064, %v1067
      %v1090 = vmul.f32 %v1063, %v1071
      %v1091 = vmul.f32 %v1062, %v1075
      %v1092 = vmul.f32 %v1061, %v1079
      %v1093 = vmul.f32 %v1060, %v1083
      %v1094 = vmul.f32 %v1059, %v1087
      %1101 = vrot.lane.b32.xlu0 %v1089, 4
      %v1102 = vpop.permute.xlu0 %1101
      %1103 = vrot.lane.b32.xlu0 %v1090, 4
      %v1104 = vpop.permute.xlu0 %1103
      %1105 = vrot.lane.b32.xlu0 %v1091, 4
      %v1106 = vpop.permute.xlu0 %1105
      %1107 = vrot.lane.b32.xlu0 %v1092, 4
      %v1108 = vpop.permute.xlu0 %1107
      %1109 = vrot.lane.b32.xlu0 %v1093, 4
      %v1110 = vpop.permute.xlu0 %1109
      %1111 = vrot.lane.b32.xlu0 %v1094, 4
      %v1112 = vpop.permute.xlu0 %1111
      %v1119 = vadd.f32 %v1044, %v1102
      %v1120 = vadd.f32 %v1045, %v1104
      %v1121 = vadd.f32 %v1046, %v1106
      %v1122 = vadd.f32 %v1047, %v1108
      %v1123 = vadd.f32 %v1048, %v1110
      %v1124 = vadd.f32 %v1049, %v1112
      %1131 = vrot.lane.b32.xlu0 %v1007, 126
      %v1132 = vpop.permute.xlu0 %1131
      %1133 = vrot.lane.b32.xlu0 %v1012, 126
      %v1134 = vpop.permute.xlu0 %1133
      %1135 = vrot.lane.b32.xlu0 %v1017, 126
      %v1136 = vpop.permute.xlu0 %1135
      %1137 = vrot.lane.b32.xlu0 %v1022, 126
      %v1138 = vpop.permute.xlu0 %1137
      %1139 = vrot.lane.b32.xlu0 %v1027, 126
      %v1140 = vpop.permute.xlu0 %1139
      %1141 = vrot.lane.b32.xlu0 %v1032, 126
      %v1142 = vpop.permute.xlu0 %1141
      %v1149 = vrot.slane %v1132, 7
      %v1150 = vrot.slane %v1134, 7
      %v1151 = vrot.slane %v1136, 7
      %v1152 = vrot.slane %v1138, 7
      %v1153 = vrot.slane %v1140, 7
      %v1154 = vrot.slane %v1142, 7
      %vm1155 = vcmp.lt.s32.totalorder %v1057, 1
      %v1156 = vsel %vm1155, %v1153, %v1154
      %v1157 = vsel %vm1155, %v1152, %v1153
      %v1158 = vsel %vm1155, %v1151, %v1152
      %v1159 = vsel %vm1155, %v1150, %v1151
      %v1160 = vsel %vm1155, %v1149, %v1150
      %v1161 = vsel %vm1155, %v1154, %v1149
      %1162 = vset.pattern.permute.xlu0 5
      %1163 = vperm.xlu0 %1162, %v397
      %v1164 = vpop.permute.xlu0 %1163
      %1166 = vset.pattern.permute.xlu0 5
      %1167 = vperm.xlu0 %1166, %v398
      %v1168 = vpop.permute.xlu0 %1167
      %1170 = vset.pattern.permute.xlu0 5
      %1171 = vperm.xlu0 %1170, %v399
      %v1172 = vpop.permute.xlu0 %1171
      %1174 = vset.pattern.permute.xlu0 5
      %1175 = vperm.xlu0 %1174, %v400
      %v1176 = vpop.permute.xlu0 %1175
      %1178 = vset.pattern.permute.xlu0 5
      %1179 = vperm.xlu0 %1178, %v401
      %v1180 = vpop.permute.xlu0 %1179
      %1182 = vset.pattern.permute.xlu0 5
      %1183 = vperm.xlu0 %1182, %v402
      %v1184 = vpop.permute.xlu0 %1183
      %v1186 = vmul.f32 %v1161, %v1164
      %v1187 = vmul.f32 %v1160, %v1168
      %v1188 = vmul.f32 %v1159, %v1172
      %v1189 = vmul.f32 %v1158, %v1176
      %v1190 = vmul.f32 %v1157, %v1180
      %v1191 = vmul.f32 %v1156, %v1184
      %1198 = vrot.lane.b32.xlu0 %v1186, 4
      %v1199 = vpop.permute.xlu0 %1198
      %1200 = vrot.lane.b32.xlu0 %v1187, 4
      %v1201 = vpop.permute.xlu0 %1200
      %1202 = vrot.lane.b32.xlu0 %v1188, 4
      %v1203 = vpop.permute.xlu0 %1202
      %1204 = vrot.lane.b32.xlu0 %v1189, 4
      %v1205 = vpop.permute.xlu0 %1204
      %1206 = vrot.lane.b32.xlu0 %v1190, 4
      %v1207 = vpop.permute.xlu0 %1206
      %1208 = vrot.lane.b32.xlu0 %v1191, 4
      %v1209 = vpop.permute.xlu0 %1208
      %v1216 = vadd.f32 %v1119, %v1199
      %v1217 = vadd.f32 %v1120, %v1201
      %v1218 = vadd.f32 %v1121, %v1203
      %v1219 = vadd.f32 %v1122, %v1205
      %v1220 = vadd.f32 %v1123, %v1207
      %v1221 = vadd.f32 %v1124, %v1209
      %1222 = vrot.lane.b32.xlu0 %v1007, 122
      %v1223 = vpop.permute.xlu0 %1222
      %1224 = vrot.lane.b32.xlu0 %v1012, 122
      %v1225 = vpop.permute.xlu0 %1224
      %1226 = vrot.lane.b32.xlu0 %v1017, 122
      %v1227 = vpop.permute.xlu0 %1226
      %1228 = vrot.lane.b32.xlu0 %v1022, 122
      %v1229 = vpop.permute.xlu0 %1228
      %1230 = vrot.lane.b32.xlu0 %v1027, 122
      %v1231 = vpop.permute.xlu0 %1230
      %1232 = vrot.lane.b32.xlu0 %v1032, 122
      %v1233 = vpop.permute.xlu0 %1232
      %v1240 = vrot.slane %v1223, 1
      %v1241 = vrot.slane %v1225, 1
      %v1242 = vrot.slane %v1227, 1
      %v1243 = vrot.slane %v1229, 1
      %v1244 = vrot.slane %v1231, 1
      %v1245 = vrot.slane %v1233, 1
      %vm1246 = vcmp.lt.s32.totalorder %v1057, 7
      %v1247 = vsel %vm1246, %v1244, %v1245
      %v1248 = vsel %vm1246, %v1243, %v1244
      %v1249 = vsel %vm1246, %v1242, %v1243
      %v1250 = vsel %vm1246, %v1241, %v1242
      %v1251 = vsel %vm1246, %v1240, %v1241
      %v1252 = vsel %vm1246, %v1245, %v1240
      %1253 = vset.pattern.permute.xlu0 3
      %1254 = vperm.xlu0 %1253, %v397
      %v1255 = vpop.permute.xlu0 %1254
      %1257 = vset.pattern.permute.xlu0 3
      %1258 = vperm.xlu0 %1257, %v398
      %v1259 = vpop.permute.xlu0 %1258
      %1261 = vset.pattern.permute.xlu0 3
      %1262 = vperm.xlu0 %1261, %v399
      %v1263 = vpop.permute.xlu0 %1262
      %1265 = vset.pattern.permute.xlu0 3
      %1266 = vperm.xlu0 %1265, %v400
      %v1267 = vpop.permute.xlu0 %1266
      %1269 = vset.pattern.permute.xlu0 3
      %1270 = vperm.xlu0 %1269, %v401
      %v1271 = vpop.permute.xlu0 %1270
      %1273 = vset.pattern.permute.xlu0 3
      %1274 = vperm.xlu0 %1273, %v402
      %v1275 = vpop.permute.xlu0 %1274
      %v1277 = vmul.f32 %v1251, %v1255
      %v1278 = vmul.f32 %v1250, %v1259
      %v1279 = vmul.f32 %v1249, %v1263
      %v1280 = vmul.f32 %v1248, %v1267
      %v1281 = vmul.f32 %v1247, %v1271
      %v1282 = vmul.f32 %v1252, %v1275
      %1289 = vrot.lane.b32.xlu0 %v1277, 4
      %v1290 = vpop.permute.xlu0 %1289
      %1291 = vrot.lane.b32.xlu0 %v1278, 4
      %v1292 = vpop.permute.xlu0 %1291
      %1293 = vrot.lane.b32.xlu0 %v1279, 4
      %v1294 = vpop.permute.xlu0 %1293
      %1295 = vrot.lane.b32.xlu0 %v1280, 4
      %v1296 = vpop.permute.xlu0 %1295
      %1297 = vrot.lane.b32.xlu0 %v1281, 4
      %v1298 = vpop.permute.xlu0 %1297
      %1299 = vrot.lane.b32.xlu0 %v1282, 4
      %v1300 = vpop.permute.xlu0 %1299
      %v1307 = vadd.f32 %v1216, %v1290
      %v1308 = vadd.f32 %v1217, %v1292
      %v1309 = vadd.f32 %v1218, %v1294
      %v1310 = vadd.f32 %v1219, %v1296
      %v1311 = vadd.f32 %v1220, %v1298
      %v1312 = vadd.f32 %v1221, %v1300
      %1313 = vrot.lane.b32.xlu0 %v1007, 120
      %v1314 = vpop.permute.xlu0 %1313
      %1315 = vrot.lane.b32.xlu0 %v1012, 120
      %v1316 = vpop.permute.xlu0 %1315
      %1317 = vrot.lane.b32.xlu0 %v1017, 120
      %v1318 = vpop.permute.xlu0 %1317
      %1319 = vrot.lane.b32.xlu0 %v1022, 120
      %v1320 = vpop.permute.xlu0 %1319
      %1321 = vrot.lane.b32.xlu0 %v1027, 120
      %v1322 = vpop.permute.xlu0 %1321
      %1323 = vrot.lane.b32.xlu0 %v1032, 120
      %v1324 = vpop.permute.xlu0 %1323
      %v1331 = vrot.slane %v1314, 2
      %v1332 = vrot.slane %v1316, 2
      %v1333 = vrot.slane %v1318, 2
      %v1334 = vrot.slane %v1320, 2
      %v1335 = vrot.slane %v1322, 2
      %v1336 = vrot.slane %v1324, 2
      %vm1337 = vcmp.lt.s32.totalorder %v1057, 6
      %v1338 = vsel %vm1337, %v1335, %v1336
      %v1339 = vsel %vm1337, %v1334, %v1335
      %v1340 = vsel %vm1337, %v1333, %v1334
      %v1341 = vsel %vm1337, %v1332, %v1333
      %v1342 = vsel %vm1337, %v1331, %v1332
      %v1343 = vsel %vm1337, %v1336, %v1331
      %1344 = vset.pattern.permute.xlu0 4
      %1345 = vperm.xlu0 %1344, %v397
      %v1346 = vpop.permute.xlu0 %1345
      %1348 = vset.pattern.permute.xlu0 4
      %1349 = vperm.xlu0 %1348, %v398
      %v1350 = vpop.permute.xlu0 %1349
      %1352 = vset.pattern.permute.xlu0 4
      %1353 = vperm.xlu0 %1352, %v399
      %v1354 = vpop.permute.xlu0 %1353
      %1356 = vset.pattern.permute.xlu0 4
      %1357 = vperm.xlu0 %1356, %v400
      %v1358 = vpop.permute.xlu0 %1357
      %1360 = vset.pattern.permute.xlu0 4
      %1361 = vperm.xlu0 %1360, %v401
      %v1362 = vpop.permute.xlu0 %1361
      %1364 = vset.pattern.permute.xlu0 4
      %1365 = vperm.xlu0 %1364, %v402
      %v1366 = vpop.permute.xlu0 %1365
      %v1368 = vmul.f32 %v1342, %v1346
      %v1369 = vmul.f32 %v1341, %v1350
      %v1370 = vmul.f32 %v1340, %v1354
      %v1371 = vmul.f32 %v1339, %v1358
      %v1372 = vmul.f32 %v1338, %v1362
      %v1373 = vmul.f32 %v1343, %v1366
      %1380 = vrot.lane.b32.xlu0 %v1368, 4
      %v1381 = vpop.permute.xlu0 %1380
      %1382 = vrot.lane.b32.xlu0 %v1369, 4
      %v1383 = vpop.permute.xlu0 %1382
      %1384 = vrot.lane.b32.xlu0 %v1370, 4
      %v1385 = vpop.permute.xlu0 %1384
      %1386 = vrot.lane.b32.xlu0 %v1371, 4
      %v1387 = vpop.permute.xlu0 %1386
      %1388 = vrot.lane.b32.xlu0 %v1372, 4
      %v1389 = vpop.permute.xlu0 %1388
      %1390 = vrot.lane.b32.xlu0 %v1373, 4
      %v1391 = vpop.permute.xlu0 %1390
      %v1398 = vadd.f32 %v1307, %v1381
      %v1399 = vadd.f32 %v1308, %v1383
      %v1400 = vadd.f32 %v1309, %v1385
      %v1401 = vadd.f32 %v1310, %v1387
      %v1402 = vadd.f32 %v1311, %v1389
      %v1403 = vadd.f32 %v1312, %v1391
      %1404 = vrot.lane.b32.xlu0 %v1040, 8
      %v1405 = vpop.permute.xlu0 %1404
      %v1407 = vadd.f32 %v1007, %v1405
      %v1408 = vadd.f32 %v1012, %v1405
      %v1409 = vadd.f32 %v1017, %v1405
      %v1410 = vadd.f32 %v1022, %v1405
      %v1411 = vadd.f32 %v1027, %v1405
      %v1412 = vadd.f32 %v1032, %v1405
      %1413 = vset.pattern.permute.xlu0 1
      %1414 = vperm.xlu0 %1413, %v397
      %v1415 = vpop.permute.xlu0 %1414
      %1417 = vset.pattern.permute.xlu0 1
      %1418 = vperm.xlu0 %1417, %v398
      %v1419 = vpop.permute.xlu0 %1418
      %1421 = vset.pattern.permute.xlu0 1
      %1422 = vperm.xlu0 %1421, %v399
      %v1423 = vpop.permute.xlu0 %1422
      %1425 = vset.pattern.permute.xlu0 1
      %1426 = vperm.xlu0 %1425, %v400
      %v1427 = vpop.permute.xlu0 %1426
      %1429 = vset.pattern.permute.xlu0 1
      %1430 = vperm.xlu0 %1429, %v401
      %v1431 = vpop.permute.xlu0 %1430
      %1433 = vset.pattern.permute.xlu0 1
      %1434 = vperm.xlu0 %1433, %v402
      %v1435 = vpop.permute.xlu0 %1434
      %v1437 = vmul.f32 %v1415, %v1407
      %v1438 = vmul.f32 %v1419, %v1408
      %v1439 = vmul.f32 %v1423, %v1409
      %v1440 = vmul.f32 %v1427, %v1410
      %v1441 = vmul.f32 %v1431, %v1411
      %v1442 = vmul.f32 %v1435, %v1412
      %1449 = vrot.lane.b32.xlu0 %v1437, 122
      %v1450 = vpop.permute.xlu0 %1449
      %1451 = vrot.lane.b32.xlu0 %v1438, 122
      %v1452 = vpop.permute.xlu0 %1451
      %1453 = vrot.lane.b32.xlu0 %v1439, 122
      %v1454 = vpop.permute.xlu0 %1453
      %1455 = vrot.lane.b32.xlu0 %v1440, 122
      %v1456 = vpop.permute.xlu0 %1455
      %1457 = vrot.lane.b32.xlu0 %v1441, 122
      %v1458 = vpop.permute.xlu0 %1457
      %1459 = vrot.lane.b32.xlu0 %v1442, 122
      %v1460 = vpop.permute.xlu0 %1459
      %v1467 = vsub.f32 %v1398, %v1450
      %v1468 = vsub.f32 %v1399, %v1452
      %v1469 = vsub.f32 %v1400, %v1454
      %v1470 = vsub.f32 %v1401, %v1456
      %v1471 = vsub.f32 %v1402, %v1458
      %v1472 = vsub.f32 %v1403, %v1460
      %1473 = vset.pattern.permute.xlu0 2
      %1474 = vperm.xlu0 %1473, %v397
      %v1475 = vpop.permute.xlu0 %1474
      %1477 = vset.pattern.permute.xlu0 2
      %1478 = vperm.xlu0 %1477, %v398
      %v1479 = vpop.permute.xlu0 %1478
      %1481 = vset.pattern.permute.xlu0 2
      %1482 = vperm.xlu0 %1481, %v399
      %v1483 = vpop.permute.xlu0 %1482
      %1485 = vset.pattern.permute.xlu0 2
      %1486 = vperm.xlu0 %1485, %v400
      %v1487 = vpop.permute.xlu0 %1486
      %1489 = vset.pattern.permute.xlu0 2
      %1490 = vperm.xlu0 %1489, %v401
      %v1491 = vpop.permute.xlu0 %1490
      %1493 = vset.pattern.permute.xlu0 2
      %1494 = vperm.xlu0 %1493, %v402
      %v1495 = vpop.permute.xlu0 %1494
      %v1497 = vmul.f32 %v1475, %v1407
      %v1498 = vmul.f32 %v1479, %v1408
      %v1499 = vmul.f32 %v1483, %v1409
      %v1500 = vmul.f32 %v1487, %v1410
      %v1501 = vmul.f32 %v1491, %v1411
      %v1502 = vmul.f32 %v1495, %v1412
      %1509 = vrot.lane.b32.xlu0 %v1497, 120
      %v1510 = vpop.permute.xlu0 %1509
      %1511 = vrot.lane.b32.xlu0 %v1498, 120
      %v1512 = vpop.permute.xlu0 %1511
      %1513 = vrot.lane.b32.xlu0 %v1499, 120
      %v1514 = vpop.permute.xlu0 %1513
      %1515 = vrot.lane.b32.xlu0 %v1500, 120
      %v1516 = vpop.permute.xlu0 %1515
      %1517 = vrot.lane.b32.xlu0 %v1501, 120
      %v1518 = vpop.permute.xlu0 %1517
      %1519 = vrot.lane.b32.xlu0 %v1502, 120
      %v1520 = vpop.permute.xlu0 %1519
      %v1527 = vsub.f32 %v1467, %v1510
      %v1528 = vsub.f32 %v1468, %v1512
      %v1529 = vsub.f32 %v1469, %v1514
      %v1530 = vsub.f32 %v1470, %v1516
      %v1531 = vsub.f32 %v1471, %v1518
      %v1532 = vsub.f32 %v1472, %v1520
      %1539 = vrot.lane.b32.xlu0 %v1527, 124
      %v1540 = vpop.permute.xlu0 %1539
      %1541 = vrot.lane.b32.xlu0 %v1528, 124
      %v1542 = vpop.permute.xlu0 %1541
      %1543 = vrot.lane.b32.xlu0 %v1529, 124
      %v1544 = vpop.permute.xlu0 %1543
      %1545 = vrot.lane.b32.xlu0 %v1530, 124
      %v1546 = vpop.permute.xlu0 %1545
      %1547 = vrot.lane.b32.xlu0 %v1531, 124
      %v1548 = vpop.permute.xlu0 %1547
      %1549 = vrot.lane.b32.xlu0 %v1532, 124
      %v1550 = vpop.permute.xlu0 %1549
      %vm1557 = vcmask 15360
      %1558 = vst.msk [vmem:[%s388] sm:$0xff] %vm1557, %v1540
      %1559 = vst.msk [vmem:[%s388 + $0x8] sm:$0xff] %vm1557, %v1542
      %1560 = vst.msk [vmem:[%s388 + $0x10] sm:$0xff] %vm1557, %v1544
      %1561 = vst.msk [vmem:[%s388 + $0x18] sm:$0xff] %vm1557, %v1546
      %1562 = vst.msk [vmem:[%s388 + $0x20] sm:$0xff] %vm1557, %v1548
      %1563 = vst.msk [vmem:[%s388 + $0x28] sm:$0xff] %vm1557, %v1550
      %s1564 = smul.u32 3, %s21
      %p1565 = scmp.lt.s32.totalorder %s1564, 5
      %s1566 = scalar_select %p1565, %s1564, 5
      %s1567 = smul.addr %s1566, 2
      %s1568 = smul.addr %s1567, 8
      %s1569 = scalar_lea.vmem %s10, %s1568
      // Predicated region
      $region61: #{tpu_custom_call.1} parent=59 // pred_check
        %p1570 = pneg %p259
      $region62: #{tpu_custom_call.1} parent=59 // pred_check_branch
        %1572 = sbr.rel (%p1570) target = $region64
      $region63: #{tpu_custom_call.1} parent=59 // pred_region
        %s1573 = smul.u32 3, %s21
      $region64: #{tpu_custom_call.1} parent=59 // pred_fallthru
        _
    $region60: #{tpu_custom_call.1} parent=5 // pred_fallthru
      _
    %p1574 = scmp.le.s32.totalorder 2, %s16
    // Predicated region
    $region65: #{tpu_custom_call.1} parent=5 // pred_check
      %p1575 = pneg %p1574
    $region66: #{tpu_custom_call.1} parent=5 // pred_check_branch
      %1577 = sbr.rel (%p1575) target = $region68
    $region67: #{tpu_custom_call.1} parent=5 // pred_region
      %s1578 = ssub.s32 %s16, 2
      // Predicated region
      $region69: #{tpu_custom_call.1} parent=67 // pred_check
        %p1579 = pneg %p265
      $region70: #{tpu_custom_call.1} parent=67 // pred_check_branch
        %1581 = sbr.rel (%p1579) target = $region72
      $region71: #{tpu_custom_call.1} parent=67 // pred_region
        %s1582 = smul.u32 3, %s22
        %p1583 = scmp.lt.s32.totalorder %s1582, 5
        %s1584 = scalar_select %p1583, %s1582, 5
        %s1585 = smul.addr %s1584, 2
        %s1586 = smul.addr %s1585, 8
        %s1587 = scalar_lea.vmem %s10, %s1586
      $region72: #{tpu_custom_call.1} parent=67 // pred_fallthru
        _
    $region68: #{tpu_custom_call.1} parent=5 // pred_fallthru
      _
  $region6: #{tpu_custom_call.1} parent=0 // loop_footer
    %s20 = sadd.s32 1, %s16
  $region7: #{tpu_custom_call.1} parent=0 // loop_footer_branch
    %15 = sbr.rel target = $region3
  $region8: #{tpu_custom_call.1} parent=0 // loop_exit
    _

</llo_original>
